<compile_context>
chip_gen: v7x
topology: tpu7x:2x2x1
jax: 0.10.0
libtpu: 0.0.40
codegen_flags: <defaults>
</compile_context>

<pallas_src>
import functools

import jax
import jax.numpy as jnp
from jax.experimental import pallas as pl
from jax.experimental.pallas import tpu as pltpu

# MXU operand dtype.  jnp.float32 -> bit-faithful to the f32 reference.
# jnp.bfloat16 -> ~3x fewer MXU passes (per perf review); re-check tolerance.
_MXU_DTYPE = jnp.float32


# --------------------------------------------------------------------------
# Fused kernel: bidirectional LSTM recurrence + Linear embedding.
# Single invocation (no grid). All operands live in VMEM.
# --------------------------------------------------------------------------
def _bilstm_embed_kernel(x_ref,        # (T*B, nIn)
                         wih_ref,      # (nIn, 8H)  gate-interleaved fwd/bwd
                         b_ref,        # (1, 8H)
                         whh_ref,      # (2H, 8H)   block-diagonal fwd/bwd
                         wemb_ref,     # (2H, nOut_pad)
                         bemb_ref,     # (1, nOut_pad)
                         out_ref,      # (T*B, nOut_pad)
                         rec_ref,      # VMEM scratch (T*B, 2H): [:, :H]=fwd, [:, H:]=bwd
                         *, T, B, H):
    H2 = 2 * H
    H8 = 8 * H

    x2d = x_ref[...].astype(_MXU_DTYPE)

    # ---- prologue: both directions' input projections in ONE matmul --------
    xw = (jnp.dot(x2d, wih_ref[...], preferred_element_type=jnp.float32)
          + b_ref[...])                                   # (T*B, 8H) f32

    whh = whh_ref[...]                                    # (2H, 8H)

    # Lane mask selecting the forward half of every interleaved gate group.
    # Gate layout along 8H lanes: [i_f|i_b | f_f|f_b | g_f|g_b | o_f|o_b].
    lane = jax.lax.broadcasted_iota(jnp.int32, (B, H8), dimension=1)
    fwd_lane = (lane % H2) < H                            # hoisted out of loop

    # Stacked carries: lanes [0:H] = forward state, lanes [H:2H] = backward.
    h_cat = jnp.zeros((B, H2), jnp.float32)
    c_cat = jnp.zeros((B, H2), jnp.float32)

    # T is a trace-time constant -> fully unrolled; h/c stay in vregs and all
    # slices below are static.
    for t in range(T):
        tb = T - 1 - t                                    # reversed time for bwd dir

        # ONE recurrent matmul per step for BOTH directions (block-diag whh):
        # (B, 2H) x (2H, 8H) -> (B, 8H).
        hh = jnp.dot(h_cat.astype(_MXU_DTYPE), whh,
                     preferred_element_type=jnp.float32)

        # Forward gates read x_t, backward gates read x_{T-1-t}: one select.
        pre = jnp.where(fwd_lane,
                        xw[t * B:(t + 1) * B, :],
                        xw[tb * B:(tb + 1) * B, :]) + hh  # (B, 8H)

        # Fused gate math for both directions: two full-row transcendentals
        # (+ one tanh(c)) instead of 10 sub-row calls.
        sg = jax.nn.sigmoid(pre)
        th = jnp.tanh(pre)
        i_g = sg[:, 0 * H2:1 * H2]
        f_g = sg[:, 1 * H2:2 * H2]
        g_g = th[:, 2 * H2:3 * H2]
        o_g = sg[:, 3 * H2:4 * H2]
        c_cat = f_g * c_cat + i_g * g_g
        h_cat = o_g * jnp.tanh(c_cat)

        # Forward h belongs to timestep t, backward h to timestep T-1-t.
        rec_ref[t * B:(t + 1) * B, 0:H] = h_cat[:, 0:H]
        rec_ref[tb * B:(tb + 1) * B, H:H2] = h_cat[:, H:H2]

    # ---- epilogue: single K=2H Linear, lane-dense (padded) output -----------
    out_ref[...] = (
        jnp.dot(rec_ref[...].astype(_MXU_DTYPE), wemb_ref[...],
                preferred_element_type=jnp.float32)
        + bemb_ref[...])


# --------------------------------------------------------------------------
# One-time parameter packing (outside the serial path).
# Input layout matches fused-gate PyTorch weights transposed:
#   wih_* (nIn, 4H), whh_* (H, 4H), b_* (1, 4H)  with gate order (i, f, g, o)
#   w_emb (2H, nOut), b_emb (1, nOut)
# --------------------------------------------------------------------------
def pack_params(p):
    H = p["whh_f"].shape[0]
    nOut = p["w_emb"].shape[1]
    nOut_pad = ((nOut + 127) // 128) * 128        # lane-dense epilogue/store

    def interleave(wf, wb):
        # (K, 4H) x 2 -> (K, 8H) with per-gate column layout [gate_fwd|gate_bwd].
        cols = []
        for k in range(4):
            cols.append(wf[:, k * H:(k + 1) * H])
            cols.append(wb[:, k * H:(k + 1) * H])
        return jnp.concatenate(cols, axis=1)

    zeros = jnp.zeros_like(p["whh_f"])
    whh = jnp.concatenate([interleave(p["whh_f"], zeros),    # rows 0:H  <- h_f
                           interleave(zeros, p["whh_b"])],   # rows H:2H <- h_b
                          axis=0)                             # (2H, 8H) block-diag

    return {
        "wih": interleave(p["wih_f"], p["wih_b"]).astype(_MXU_DTYPE),      # (nIn, 8H)
        "b": interleave(p["b_f"], p["b_b"]).astype(jnp.float32),           # (1, 8H)
        "whh": whh.astype(_MXU_DTYPE),                                     # (2H, 8H)
        "w_emb": jnp.pad(p["w_emb"],
                         ((0, 0), (0, nOut_pad - nOut))).astype(_MXU_DTYPE),
        "b_emb": jnp.pad(p["b_emb"],
                         ((0, 0), (0, nOut_pad - nOut))).astype(jnp.float32),
    }


# --------------------------------------------------------------------------
# Module forward: (T, B, nIn) -> (T, B, nOut)
# --------------------------------------------------------------------------
@functools.partial(jax.jit, static_argnames=("nOut",))
def bidirectional_lstm_forward(x, packed, nOut):
    T, B, nIn = x.shape
    H = packed["whh"].shape[0] // 2
    nOut_pad = packed["w_emb"].shape[1]

    x2d = x.reshape(T * B, nIn)
    kernel = functools.partial(_bilstm_embed_kernel, T=T, B=B, H=H)

    out2d = pl.pallas_call(
        kernel,
        out_shape=jax.ShapeDtypeStruct((T * B, nOut_pad), jnp.float32),
        scratch_shapes=[
            pltpu.VMEM((T * B, 2 * H), jnp.float32),  # [hf | hb] recurrent states
        ],
    )(x2d, packed["wih"], packed["b"], packed["whh"],
      packed["w_emb"], packed["b_emb"])

    return out2d[:, :nOut].reshape(T, B, nOut)


# --------------------------------------------------------------------------
# Pure-JAX reference (correctness check only), standard per-direction layout.
# --------------------------------------------------------------------------
def _lstm_scan_ref(x, wih, whh, b):
    B = x.shape[1]
    H = whh.shape[0]

    def step(carry, xt):
        h, c = carry
        pre = xt @ wih + h @ whh + b             # (B, 4H), gate order i,f,g,o
        i_g = jax.nn.sigmoid(pre[:, 0 * H:1 * H])
        f_g = jax.nn.sigmoid(pre[:, 1 * H:2 * H])
        g_g = jnp.tanh(pre[:, 2 * H:3 * H])
        o_g = jax.nn.sigmoid(pre[:, 3 * H:4 * H])
        c = f_g * c + i_g * g_g
        h = o_g * jnp.tanh(c)
        return (h, c), h

    init = (jnp.zeros((B, H), jnp.float32), jnp.zeros((B, H), jnp.float32))
    _, hs = jax.lax.scan(step, init, x)
    return hs


def reference_forward(x, p):
    hf = _lstm_scan_ref(x, p["wih_f"], p["whh_f"], p["b_f"])
    hb = _lstm_scan_ref(x[::-1], p["wih_b"], p["whh_b"], p["b_b"])[::-1]
    rec = jnp.concatenate([hf, hb], axis=-1)
    T, B, h2 = rec.shape
    out = rec.reshape(T * B, h2) @ p["w_emb"] + p["b_emb"]
    return out.reshape(T, B, -1)


if __name__ == "__main__":
    # Small shapes consistent with BidirectionalLSTM(nIn, nHidden, nOut).
    T, B, nIn, H, nOut = 8, 2, 32, 32, 16

    key = jax.random.PRNGKey(0)
    ks = jax.random.split(key, 10)
    s = 1.0 / (H ** 0.5)  # PyTorch-style uniform(-1/sqrt(H), 1/sqrt(H)) init
    u = lambda k, shape: jax.random.uniform(k, shape, jnp.float32, -s, s)

    params = {
        # forward direction, fused gates (i, f, g, o); bias = b_ih + b_hh folded
        "wih_f": u(ks[1], (nIn, 4 * H)),
        "whh_f": u(ks[2], (H, 4 * H)),
        "b_f":   u(ks[3], (1, 4 * H)),
        # backward direction
        "wih_b": u(ks[4], (nIn, 4 * H)),
        "whh_b": u(ks[5], (H, 4 * H)),
        "b_b":   u(ks[6], (1, 4 * H)),
        # embedding Linear(2H -> nOut): stored transposed (2H, nOut) + (1, nOut)
        "w_emb": u(ks[7], (2 * H, nOut)),
        "b_emb": u(ks[8], (1, nOut)),
    }

    x = jax.random.normal(ks[0], (T, B, nIn), jnp.float32)

    packed = pack_params(params)

    out = bidirectional_lstm_forward(x, packed, nOut)
    out = jax.block_until_ready(out)

    ref = reference_forward(x, params)
    max_err = float(jnp.max(jnp.abs(out - ref)))
    assert out.shape == (T, B, nOut), out.shape
    assert max_err < 1e-3, f"mismatch vs reference: {max_err}"

    print("KERNEL_OK")
</pallas_src>

<mosaic_0001>
module attributes {stable_mosaic.version = 11 : i64} {
  func.func @_bilstm_embed_kernel(%arg0: memref<16x32xf32, #tpu.memory_space<vmem>>, %arg1: memref<32x256xf32, #tpu.memory_space<vmem>>, %arg2: memref<1x256xf32, #tpu.memory_space<vmem>>, %arg3: memref<64x256xf32, #tpu.memory_space<vmem>>, %arg4: memref<64x128xf32, #tpu.memory_space<vmem>>, %arg5: memref<1x128xf32, #tpu.memory_space<vmem>>, %arg6: memref<16x128xf32, #tpu.memory_space<vmem>>, %arg7: memref<16x64xf32, #tpu.memory_space<vmem>>) attributes {dimension_semantics = [], scalar_prefetch = 0 : i64, scratch_operands = 1 : i64, tpu.core_type = #tpu.core_type<tc>} {
    %c0 = arith.constant 0 : index
    %c0_0 = arith.constant 0 : index
    %0 = vector.load %arg0[%c0, %c0_0] : memref<16x32xf32, #tpu.memory_space<vmem>>, vector<16x32xf32>
    %c0_1 = arith.constant 0 : index
    %c0_2 = arith.constant 0 : index
    %1 = vector.load %arg1[%c0_1, %c0_2] : memref<32x256xf32, #tpu.memory_space<vmem>>, vector<32x256xf32>
    %cst = arith.constant dense<0.000000e+00> : vector<16x256xf32>
    %2 = tpu.matmul %0, %1, %cst {dimension_numbers = #tpu.dot_dimension_numbers<[1], [0], [0], [1], [0, 0, 1, 1], [], []>} : vector<16x32xf32>, vector<32x256xf32>, vector<16x256xf32> -> vector<16x256xf32>
    %c0_3 = arith.constant 0 : index
    %c0_4 = arith.constant 0 : index
    %3 = vector.load %arg2[%c0_3, %c0_4] : memref<1x256xf32, #tpu.memory_space<vmem>>, vector<1x256xf32>
    %4 = vector.broadcast %3 : vector<1x256xf32> to vector<16x256xf32>
    %5 = arith.addf %2, %4 : vector<16x256xf32>
    %c0_5 = arith.constant 0 : index
    %c0_6 = arith.constant 0 : index
    %6 = vector.load %arg3[%c0_5, %c0_6] : memref<64x256xf32, #tpu.memory_space<vmem>>, vector<64x256xf32>
    %7 = tpu.iota {dimensions = array<i32: 1>} : vector<2x256xi32>
    %c64_i32 = arith.constant 64 : i32
    %c0_i32 = arith.constant 0 : i32
    %8 = arith.cmpi eq, %c64_i32, %c0_i32 : i32
    %c1_i32 = arith.constant 1 : i32
    %9 = arith.select %8, %c1_i32, %c64_i32 : i32
    %10 = vector.broadcast %9 : i32 to vector<2x256xi32>
    %11 = arith.remsi %7, %10 : vector<2x256xi32>
    %c0_i32_7 = arith.constant 0 : i32
    %12 = vector.broadcast %c0_i32_7 : i32 to vector<2x256xi32>
    %13 = arith.cmpi ne, %11, %12 : vector<2x256xi32>
    %c0_i32_8 = arith.constant 0 : i32
    %14 = vector.broadcast %c0_i32_8 : i32 to vector<2x256xi32>
    %15 = arith.cmpi slt, %11, %14 : vector<2x256xi32>
    %c0_i32_9 = arith.constant 0 : i32
    %16 = arith.cmpi slt, %9, %c0_i32_9 : i32
    %17 = vector.broadcast %16 : i1 to vector<2x256xi1>
    %18 = vector.broadcast %17 : vector<2x256xi1> to vector<2x256xi1>
    %19 = arith.xori %15, %18 : vector<2x256xi1>
    %20 = arith.andi %19, %13 : vector<2x256xi1>
    %21 = vector.broadcast %9 : i32 to vector<2x256xi32>
    %22 = arith.addi %11, %21 : vector<2x256xi32>
    %23 = arith.select %20, %22, %11 : vector<2x256xi1>, vector<2x256xi32>
    %c32_i32 = arith.constant 32 : i32
    %24 = vector.broadcast %c32_i32 : i32 to vector<2x256xi32>
    %25 = arith.cmpi slt, %23, %24 : vector<2x256xi32>
    %cst_10 = arith.constant 0.000000e+00 : f32
    %26 = vector.broadcast %cst_10 : f32 to vector<2x64xf32>
    %cst_11 = arith.constant 0.000000e+00 : f32
    %27 = vector.broadcast %cst_11 : f32 to vector<2x64xf32>
    %cst_12 = arith.constant dense<0.000000e+00> : vector<2x256xf32>
    %28 = tpu.matmul %26, %6, %cst_12 {dimension_numbers = #tpu.dot_dimension_numbers<[1], [0], [0], [1], [0, 0, 1, 1], [], []>} : vector<2x64xf32>, vector<64x256xf32>, vector<2x256xf32> -> vector<2x256xf32>
    %29 = vector.extract_strided_slice %5 {offsets = [0, 0], sizes = [2, 256], strides = [1, 1]} : vector<16x256xf32> to vector<2x256xf32>
    %30 = vector.extract_strided_slice %5 {offsets = [14, 0], sizes = [2, 256], strides = [1, 1]} : vector<16x256xf32> to vector<2x256xf32>
    %31 = arith.select %25, %29, %30 : vector<2x256xi1>, vector<2x256xf32>
    %32 = arith.addf %31, %28 : vector<2x256xf32>
    %33 = arith.negf %32 : vector<2x256xf32>
    %34 = math.exp %33 : vector<2x256xf32>
    %cst_13 = arith.constant 1.000000e+00 : f32
    %35 = vector.broadcast %cst_13 : f32 to vector<2x256xf32>
    %36 = arith.addf %35, %34 : vector<2x256xf32>
    %37 = arith.divf %35, %36 : vector<2x256xf32>
    %38 = math.tanh %32 : vector<2x256xf32>
    %39 = vector.extract_strided_slice %37 {offsets = [0, 0], sizes = [2, 64], strides = [1, 1]} : vector<2x256xf32> to vector<2x64xf32>
    %40 = vector.extract_strided_slice %37 {offsets = [0, 64], sizes = [2, 64], strides = [1, 1]} : vector<2x256xf32> to vector<2x64xf32>
    %41 = vector.extract_strided_slice %38 {offsets = [0, 128], sizes = [2, 64], strides = [1, 1]} : vector<2x256xf32> to vector<2x64xf32>
    %42 = vector.extract_strided_slice %37 {offsets = [0, 192], sizes = [2, 64], strides = [1, 1]} : vector<2x256xf32> to vector<2x64xf32>
    %43 = arith.mulf %40, %27 : vector<2x64xf32>
    %44 = arith.mulf %39, %41 : vector<2x64xf32>
    %45 = arith.addf %43, %44 : vector<2x64xf32>
    %46 = math.tanh %45 : vector<2x64xf32>
    %47 = arith.mulf %42, %46 : vector<2x64xf32>
    %48 = vector.extract_strided_slice %47 {offsets = [0, 0], sizes = [2, 32], strides = [1, 1]} : vector<2x64xf32> to vector<2x32xf32>
    %c0_14 = arith.constant 0 : index
    %c0_15 = arith.constant 0 : index
    %49 = vector.load %arg7[%c0_14, %c0_15] : memref<16x64xf32, #tpu.memory_space<vmem>>, vector<2x32xf32>
    tpu.vector_store %arg7[%c0_14, %c0_15], %48 {strides = array<i32>} : memref<16x64xf32, #tpu.memory_space<vmem>>, vector<2x32xf32>,
    %50 = vector.extract_strided_slice %47 {offsets = [0, 32], sizes = [2, 32], strides = [1, 1]} : vector<2x64xf32> to vector<2x32xf32>
    %c14 = arith.constant 14 : index
    %c32 = arith.constant 32 : index
    %51 = vector.load %arg7[%c14, %c32] : memref<16x64xf32, #tpu.memory_space<vmem>>, vector<2x32xf32>
    tpu.vector_store %arg7[%c14, %c32], %50 {strides = array<i32>} : memref<16x64xf32, #tpu.memory_space<vmem>>, vector<2x32xf32>,
    %cst_16 = arith.constant dense<0.000000e+00> : vector<2x256xf32>
    %52 = tpu.matmul %47, %6, %cst_16 {dimension_numbers = #tpu.dot_dimension_numbers<[1], [0], [0], [1], [0, 0, 1, 1], [], []>} : vector<2x64xf32>, vector<64x256xf32>, vector<2x256xf32> -> vector<2x256xf32>
    %53 = vector.extract_strided_slice %5 {offsets = [2, 0], sizes = [2, 256], strides = [1, 1]} : vector<16x256xf32> to vector<2x256xf32>
    %54 = vector.extract_strided_slice %5 {offsets = [12, 0], sizes = [2, 256], strides = [1, 1]} : vector<16x256xf32> to vector<2x256xf32>
    %55 = arith.select %25, %53, %54 : vector<2x256xi1>, vector<2x256xf32>
    %56 = arith.addf %55, %52 : vector<2x256xf32>
    %57 = arith.negf %56 : vector<2x256xf32>
    %58 = math.exp %57 : vector<2x256xf32>
    %cst_17 = arith.constant 1.000000e+00 : f32
    %59 = vector.broadcast %cst_17 : f32 to vector<2x256xf32>
    %60 = arith.addf %59, %58 : vector<2x256xf32>
    %61 = arith.divf %59, %60 : vector<2x256xf32>
    %62 = math.tanh %56 : vector<2x256xf32>
    %63 = vector.extract_strided_slice %61 {offsets = [0, 0], sizes = [2, 64], strides = [1, 1]} : vector<2x256xf32> to vector<2x64xf32>
    %64 = vector.extract_strided_slice %61 {offsets = [0, 64], sizes = [2, 64], strides = [1, 1]} : vector<2x256xf32> to vector<2x64xf32>
    %65 = vector.extract_strided_slice %62 {offsets = [0, 128], sizes = [2, 64], strides = [1, 1]} : vector<2x256xf32> to vector<2x64xf32>
    %66 = vector.extract_strided_slice %61 {offsets = [0, 192], sizes = [2, 64], strides = [1, 1]} : vector<2x256xf32> to vector<2x64xf32>
    %67 = arith.mulf %64, %45 : vector<2x64xf32>
    %68 = arith.mulf %63, %65 : vector<2x64xf32>
    %69 = arith.addf %67, %68 : vector<2x64xf32>
    %70 = math.tanh %69 : vector<2x64xf32>
    %71 = arith.mulf %66, %70 : vector<2x64xf32>
    %72 = vector.extract_strided_slice %71 {offsets = [0, 0], sizes = [2, 32], strides = [1, 1]} : vector<2x64xf32> to vector<2x32xf32>
    %c2 = arith.constant 2 : index
    %c0_18 = arith.constant 0 : index
    %73 = vector.load %arg7[%c2, %c0_18] : memref<16x64xf32, #tpu.memory_space<vmem>>, vector<2x32xf32>
    tpu.vector_store %arg7[%c2, %c0_18], %72 {strides = array<i32>} : memref<16x64xf32, #tpu.memory_space<vmem>>, vector<2x32xf32>,
    %74 = vector.extract_strided_slice %71 {offsets = [0, 32], sizes = [2, 32], strides = [1, 1]} : vector<2x64xf32> to vector<2x32xf32>
    %c12 = arith.constant 12 : index
    %c32_19 = arith.constant 32 : index
    %75 = vector.load %arg7[%c12, %c32_19] : memref<16x64xf32, #tpu.memory_space<vmem>>, vector<2x32xf32>
    tpu.vector_store %arg7[%c12, %c32_19], %74 {strides = array<i32>} : memref<16x64xf32, #tpu.memory_space<vmem>>, vector<2x32xf32>,
    %cst_20 = arith.constant dense<0.000000e+00> : vector<2x256xf32>
    %76 = tpu.matmul %71, %6, %cst_20 {dimension_numbers = #tpu.dot_dimension_numbers<[1], [0], [0], [1], [0, 0, 1, 1], [], []>} : vector<2x64xf32>, vector<64x256xf32>, vector<2x256xf32> -> vector<2x256xf32>
    %77 = vector.extract_strided_slice %5 {offsets = [4, 0], sizes = [2, 256], strides = [1, 1]} : vector<16x256xf32> to vector<2x256xf32>
    %78 = vector.extract_strided_slice %5 {offsets = [10, 0], sizes = [2, 256], strides = [1, 1]} : vector<16x256xf32> to vector<2x256xf32>
    %79 = arith.select %25, %77, %78 : vector<2x256xi1>, vector<2x256xf32>
    %80 = arith.addf %79, %76 : vector<2x256xf32>
    %81 = arith.negf %80 : vector<2x256xf32>
    %82 = math.exp %81 : vector<2x256xf32>
    %cst_21 = arith.constant 1.000000e+00 : f32
    %83 = vector.broadcast %cst_21 : f32 to vector<2x256xf32>
    %84 = arith.addf %83, %82 : vector<2x256xf32>
    %85 = arith.divf %83, %84 : vector<2x256xf32>
    %86 = math.tanh %80 : vector<2x256xf32>
    %87 = vector.extract_strided_slice %85 {offsets = [0, 0], sizes = [2, 64], strides = [1, 1]} : vector<2x256xf32> to vector<2x64xf32>
    %88 = vector.extract_strided_slice %85 {offsets = [0, 64], sizes = [2, 64], strides = [1, 1]} : vector<2x256xf32> to vector<2x64xf32>
    %89 = vector.extract_strided_slice %86 {offsets = [0, 128], sizes = [2, 64], strides = [1, 1]} : vector<2x256xf32> to vector<2x64xf32>
    %90 = vector.extract_strided_slice %85 {offsets = [0, 192], sizes = [2, 64], strides = [1, 1]} : vector<2x256xf32> to vector<2x64xf32>
    %91 = arith.mulf %88, %69 : vector<2x64xf32>
    %92 = arith.mulf %87, %89 : vector<2x64xf32>
    %93 = arith.addf %91, %92 : vector<2x64xf32>
    %94 = math.tanh %93 : vector<2x64xf32>
    %95 = arith.mulf %90, %94 : vector<2x64xf32>
    %96 = vector.extract_strided_slice %95 {offsets = [0, 0], sizes = [2, 32], strides = [1, 1]} : vector<2x64xf32> to vector<2x32xf32>
    %c4 = arith.constant 4 : index
    %c0_22 = arith.constant 0 : index
    %97 = vector.load %arg7[%c4, %c0_22] : memref<16x64xf32, #tpu.memory_space<vmem>>, vector<2x32xf32>
    tpu.vector_store %arg7[%c4, %c0_22], %96 {strides = array<i32>} : memref<16x64xf32, #tpu.memory_space<vmem>>, vector<2x32xf32>,
    %98 = vector.extract_strided_slice %95 {offsets = [0, 32], sizes = [2, 32], strides = [1, 1]} : vector<2x64xf32> to vector<2x32xf32>
    %c10 = arith.constant 10 : index
    %c32_23 = arith.constant 32 : index
    %99 = vector.load %arg7[%c10, %c32_23] : memref<16x64xf32, #tpu.memory_space<vmem>>, vector<2x32xf32>
    tpu.vector_store %arg7[%c10, %c32_23], %98 {strides = array<i32>} : memref<16x64xf32, #tpu.memory_space<vmem>>, vector<2x32xf32>,
    %cst_24 = arith.constant dense<0.000000e+00> : vector<2x256xf32>
    %100 = tpu.matmul %95, %6, %cst_24 {dimension_numbers = #tpu.dot_dimension_numbers<[1], [0], [0], [1], [0, 0, 1, 1], [], []>} : vector<2x64xf32>, vector<64x256xf32>, vector<2x256xf32> -> vector<2x256xf32>
    %101 = vector.extract_strided_slice %5 {offsets = [6, 0], sizes = [2, 256], strides = [1, 1]} : vector<16x256xf32> to vector<2x256xf32>
    %102 = vector.extract_strided_slice %5 {offsets = [8, 0], sizes = [2, 256], strides = [1, 1]} : vector<16x256xf32> to vector<2x256xf32>
    %103 = arith.select %25, %101, %102 : vector<2x256xi1>, vector<2x256xf32>
    %104 = arith.addf %103, %100 : vector<2x256xf32>
    %105 = arith.negf %104 : vector<2x256xf32>
    %106 = math.exp %105 : vector<2x256xf32>
    %cst_25 = arith.constant 1.000000e+00 : f32
    %107 = vector.broadcast %cst_25 : f32 to vector<2x256xf32>
    %108 = arith.addf %107, %106 : vector<2x256xf32>
    %109 = arith.divf %107, %108 : vector<2x256xf32>
    %110 = math.tanh %104 : vector<2x256xf32>
    %111 = vector.extract_strided_slice %109 {offsets = [0, 0], sizes = [2, 64], strides = [1, 1]} : vector<2x256xf32> to vector<2x64xf32>
    %112 = vector.extract_strided_slice %109 {offsets = [0, 64], sizes = [2, 64], strides = [1, 1]} : vector<2x256xf32> to vector<2x64xf32>
    %113 = vector.extract_strided_slice %110 {offsets = [0, 128], sizes = [2, 64], strides = [1, 1]} : vector<2x256xf32> to vector<2x64xf32>
    %114 = vector.extract_strided_slice %109 {offsets = [0, 192], sizes = [2, 64], strides = [1, 1]} : vector<2x256xf32> to vector<2x64xf32>
    %115 = arith.mulf %112, %93 : vector<2x64xf32>
    %116 = arith.mulf %111, %113 : vector<2x64xf32>
    %117 = arith.addf %115, %116 : vector<2x64xf32>
    %118 = math.tanh %117 : vector<2x64xf32>
    %119 = arith.mulf %114, %118 : vector<2x64xf32>
    %120 = vector.extract_strided_slice %119 {offsets = [0, 0], sizes = [2, 32], strides = [1, 1]} : vector<2x64xf32> to vector<2x32xf32>
    %c6 = arith.constant 6 : index
    %c0_26 = arith.constant 0 : index
    %121 = vector.load %arg7[%c6, %c0_26] : memref<16x64xf32, #tpu.memory_space<vmem>>, vector<2x32xf32>
    tpu.vector_store %arg7[%c6, %c0_26], %120 {strides = array<i32>} : memref<16x64xf32, #tpu.memory_space<vmem>>, vector<2x32xf32>,
    %122 = vector.extract_strided_slice %119 {offsets = [0, 32], sizes = [2, 32], strides = [1, 1]} : vector<2x64xf32> to vector<2x32xf32>
    %c8 = arith.constant 8 : index
    %c32_27 = arith.constant 32 : index
    %123 = vector.load %arg7[%c8, %c32_27] : memref<16x64xf32, #tpu.memory_space<vmem>>, vector<2x32xf32>
    tpu.vector_store %arg7[%c8, %c32_27], %122 {strides = array<i32>} : memref<16x64xf32, #tpu.memory_space<vmem>>, vector<2x32xf32>,
    %cst_28 = arith.constant dense<0.000000e+00> : vector<2x256xf32>
    %124 = tpu.matmul %119, %6, %cst_28 {dimension_numbers = #tpu.dot_dimension_numbers<[1], [0], [0], [1], [0, 0, 1, 1], [], []>} : vector<2x64xf32>, vector<64x256xf32>, vector<2x256xf32> -> vector<2x256xf32>
    %125 = vector.extract_strided_slice %5 {offsets = [8, 0], sizes = [2, 256], strides = [1, 1]} : vector<16x256xf32> to vector<2x256xf32>
    %126 = vector.extract_strided_slice %5 {offsets = [6, 0], sizes = [2, 256], strides = [1, 1]} : vector<16x256xf32> to vector<2x256xf32>
    %127 = arith.select %25, %125, %126 : vector<2x256xi1>, vector<2x256xf32>
    %128 = arith.addf %127, %124 : vector<2x256xf32>
    %129 = arith.negf %128 : vector<2x256xf32>
    %130 = math.exp %129 : vector<2x256xf32>
    %cst_29 = arith.constant 1.000000e+00 : f32
    %131 = vector.broadcast %cst_29 : f32 to vector<2x256xf32>
    %132 = arith.addf %131, %130 : vector<2x256xf32>
    %133 = arith.divf %131, %132 : vector<2x256xf32>
    %134 = math.tanh %128 : vector<2x256xf32>
    %135 = vector.extract_strided_slice %133 {offsets = [0, 0], sizes = [2, 64], strides = [1, 1]} : vector<2x256xf32> to vector<2x64xf32>
    %136 = vector.extract_strided_slice %133 {offsets = [0, 64], sizes = [2, 64], strides = [1, 1]} : vector<2x256xf32> to vector<2x64xf32>
    %137 = vector.extract_strided_slice %134 {offsets = [0, 128], sizes = [2, 64], strides = [1, 1]} : vector<2x256xf32> to vector<2x64xf32>
    %138 = vector.extract_strided_slice %133 {offsets = [0, 192], sizes = [2, 64], strides = [1, 1]} : vector<2x256xf32> to vector<2x64xf32>
    %139 = arith.mulf %136, %117 : vector<2x64xf32>
    %140 = arith.mulf %135, %137 : vector<2x64xf32>
    %141 = arith.addf %139, %140 : vector<2x64xf32>
    %142 = math.tanh %141 : vector<2x64xf32>
    %143 = arith.mulf %138, %142 : vector<2x64xf32>
    %144 = vector.extract_strided_slice %143 {offsets = [0, 0], sizes = [2, 32], strides = [1, 1]} : vector<2x64xf32> to vector<2x32xf32>
    %c8_30 = arith.constant 8 : index
    %c0_31 = arith.constant 0 : index
    %145 = vector.load %arg7[%c8_30, %c0_31] : memref<16x64xf32, #tpu.memory_space<vmem>>, vector<2x32xf32>
    tpu.vector_store %arg7[%c8_30, %c0_31], %144 {strides = array<i32>} : memref<16x64xf32, #tpu.memory_space<vmem>>, vector<2x32xf32>,
    %146 = vector.extract_strided_slice %143 {offsets = [0, 32], sizes = [2, 32], strides = [1, 1]} : vector<2x64xf32> to vector<2x32xf32>
    %c6_32 = arith.constant 6 : index
    %c32_33 = arith.constant 32 : index
    %147 = vector.load %arg7[%c6_32, %c32_33] : memref<16x64xf32, #tpu.memory_space<vmem>>, vector<2x32xf32>
    tpu.vector_store %arg7[%c6_32, %c32_33], %146 {strides = array<i32>} : memref<16x64xf32, #tpu.memory_space<vmem>>, vector<2x32xf32>,
    %cst_34 = arith.constant dense<0.000000e+00> : vector<2x256xf32>
    %148 = tpu.matmul %143, %6, %cst_34 {dimension_numbers = #tpu.dot_dimension_numbers<[1], [0], [0], [1], [0, 0, 1, 1], [], []>} : vector<2x64xf32>, vector<64x256xf32>, vector<2x256xf32> -> vector<2x256xf32>
    %149 = vector.extract_strided_slice %5 {offsets = [10, 0], sizes = [2, 256], strides = [1, 1]} : vector<16x256xf32> to vector<2x256xf32>
    %150 = vector.extract_strided_slice %5 {offsets = [4, 0], sizes = [2, 256], strides = [1, 1]} : vector<16x256xf32> to vector<2x256xf32>
    %151 = arith.select %25, %149, %150 : vector<2x256xi1>, vector<2x256xf32>
    %152 = arith.addf %151, %148 : vector<2x256xf32>
    %153 = arith.negf %152 : vector<2x256xf32>
    %154 = math.exp %153 : vector<2x256xf32>
    %cst_35 = arith.constant 1.000000e+00 : f32
    %155 = vector.broadcast %cst_35 : f32 to vector<2x256xf32>
    %156 = arith.addf %155, %154 : vector<2x256xf32>
    %157 = arith.divf %155, %156 : vector<2x256xf32>
    %158 = math.tanh %152 : vector<2x256xf32>
    %159 = vector.extract_strided_slice %157 {offsets = [0, 0], sizes = [2, 64], strides = [1, 1]} : vector<2x256xf32> to vector<2x64xf32>
    %160 = vector.extract_strided_slice %157 {offsets = [0, 64], sizes = [2, 64], strides = [1, 1]} : vector<2x256xf32> to vector<2x64xf32>
    %161 = vector.extract_strided_slice %158 {offsets = [0, 128], sizes = [2, 64], strides = [1, 1]} : vector<2x256xf32> to vector<2x64xf32>
    %162 = vector.extract_strided_slice %157 {offsets = [0, 192], sizes = [2, 64], strides = [1, 1]} : vector<2x256xf32> to vector<2x64xf32>
    %163 = arith.mulf %160, %141 : vector<2x64xf32>
    %164 = arith.mulf %159, %161 : vector<2x64xf32>
    %165 = arith.addf %163, %164 : vector<2x64xf32>
    %166 = math.tanh %165 : vector<2x64xf32>
    %167 = arith.mulf %162, %166 : vector<2x64xf32>
    %168 = vector.extract_strided_slice %167 {offsets = [0, 0], sizes = [2, 32], strides = [1, 1]} : vector<2x64xf32> to vector<2x32xf32>
    %c10_36 = arith.constant 10 : index
    %c0_37 = arith.constant 0 : index
    %169 = vector.load %arg7[%c10_36, %c0_37] : memref<16x64xf32, #tpu.memory_space<vmem>>, vector<2x32xf32>
    tpu.vector_store %arg7[%c10_36, %c0_37], %168 {strides = array<i32>} : memref<16x64xf32, #tpu.memory_space<vmem>>, vector<2x32xf32>,
    %170 = vector.extract_strided_slice %167 {offsets = [0, 32], sizes = [2, 32], strides = [1, 1]} : vector<2x64xf32> to vector<2x32xf32>
    %c4_38 = arith.constant 4 : index
    %c32_39 = arith.constant 32 : index
    %171 = vector.load %arg7[%c4_38, %c32_39] : memref<16x64xf32, #tpu.memory_space<vmem>>, vector<2x32xf32>
    tpu.vector_store %arg7[%c4_38, %c32_39], %170 {strides = array<i32>} : memref<16x64xf32, #tpu.memory_space<vmem>>, vector<2x32xf32>,
    %cst_40 = arith.constant dense<0.000000e+00> : vector<2x256xf32>
    %172 = tpu.matmul %167, %6, %cst_40 {dimension_numbers = #tpu.dot_dimension_numbers<[1], [0], [0], [1], [0, 0, 1, 1], [], []>} : vector<2x64xf32>, vector<64x256xf32>, vector<2x256xf32> -> vector<2x256xf32>
    %173 = vector.extract_strided_slice %5 {offsets = [12, 0], sizes = [2, 256], strides = [1, 1]} : vector<16x256xf32> to vector<2x256xf32>
    %174 = vector.extract_strided_slice %5 {offsets = [2, 0], sizes = [2, 256], strides = [1, 1]} : vector<16x256xf32> to vector<2x256xf32>
    %175 = arith.select %25, %173, %174 : vector<2x256xi1>, vector<2x256xf32>
    %176 = arith.addf %175, %172 : vector<2x256xf32>
    %177 = arith.negf %176 : vector<2x256xf32>
    %178 = math.exp %177 : vector<2x256xf32>
    %cst_41 = arith.constant 1.000000e+00 : f32
    %179 = vector.broadcast %cst_41 : f32 to vector<2x256xf32>
    %180 = arith.addf %179, %178 : vector<2x256xf32>
    %181 = arith.divf %179, %180 : vector<2x256xf32>
    %182 = math.tanh %176 : vector<2x256xf32>
    %183 = vector.extract_strided_slice %181 {offsets = [0, 0], sizes = [2, 64], strides = [1, 1]} : vector<2x256xf32> to vector<2x64xf32>
    %184 = vector.extract_strided_slice %181 {offsets = [0, 64], sizes = [2, 64], strides = [1, 1]} : vector<2x256xf32> to vector<2x64xf32>
    %185 = vector.extract_strided_slice %182 {offsets = [0, 128], sizes = [2, 64], strides = [1, 1]} : vector<2x256xf32> to vector<2x64xf32>
    %186 = vector.extract_strided_slice %181 {offsets = [0, 192], sizes = [2, 64], strides = [1, 1]} : vector<2x256xf32> to vector<2x64xf32>
    %187 = arith.mulf %184, %165 : vector<2x64xf32>
    %188 = arith.mulf %183, %185 : vector<2x64xf32>
    %189 = arith.addf %187, %188 : vector<2x64xf32>
    %190 = math.tanh %189 : vector<2x64xf32>
    %191 = arith.mulf %186, %190 : vector<2x64xf32>
    %192 = vector.extract_strided_slice %191 {offsets = [0, 0], sizes = [2, 32], strides = [1, 1]} : vector<2x64xf32> to vector<2x32xf32>
    %c12_42 = arith.constant 12 : index
    %c0_43 = arith.constant 0 : index
    %193 = vector.load %arg7[%c12_42, %c0_43] : memref<16x64xf32, #tpu.memory_space<vmem>>, vector<2x32xf32>
    tpu.vector_store %arg7[%c12_42, %c0_43], %192 {strides = array<i32>} : memref<16x64xf32, #tpu.memory_space<vmem>>, vector<2x32xf32>,
    %194 = vector.extract_strided_slice %191 {offsets = [0, 32], sizes = [2, 32], strides = [1, 1]} : vector<2x64xf32> to vector<2x32xf32>
    %c2_44 = arith.constant 2 : index
    %c32_45 = arith.constant 32 : index
    %195 = vector.load %arg7[%c2_44, %c32_45] : memref<16x64xf32, #tpu.memory_space<vmem>>, vector<2x32xf32>
    tpu.vector_store %arg7[%c2_44, %c32_45], %194 {strides = array<i32>} : memref<16x64xf32, #tpu.memory_space<vmem>>, vector<2x32xf32>,
    %cst_46 = arith.constant dense<0.000000e+00> : vector<2x256xf32>
    %196 = tpu.matmul %191, %6, %cst_46 {dimension_numbers = #tpu.dot_dimension_numbers<[1], [0], [0], [1], [0, 0, 1, 1], [], []>} : vector<2x64xf32>, vector<64x256xf32>, vector<2x256xf32> -> vector<2x256xf32>
    %197 = vector.extract_strided_slice %5 {offsets = [14, 0], sizes = [2, 256], strides = [1, 1]} : vector<16x256xf32> to vector<2x256xf32>
    %198 = vector.extract_strided_slice %5 {offsets = [0, 0], sizes = [2, 256], strides = [1, 1]} : vector<16x256xf32> to vector<2x256xf32>
    %199 = arith.select %25, %197, %198 : vector<2x256xi1>, vector<2x256xf32>
    %200 = arith.addf %199, %196 : vector<2x256xf32>
    %201 = arith.negf %200 : vector<2x256xf32>
    %202 = math.exp %201 : vector<2x256xf32>
    %cst_47 = arith.constant 1.000000e+00 : f32
    %203 = vector.broadcast %cst_47 : f32 to vector<2x256xf32>
    %204 = arith.addf %203, %202 : vector<2x256xf32>
    %205 = arith.divf %203, %204 : vector<2x256xf32>
    %206 = math.tanh %200 : vector<2x256xf32>
    %207 = vector.extract_strided_slice %205 {offsets = [0, 0], sizes = [2, 64], strides = [1, 1]} : vector<2x256xf32> to vector<2x64xf32>
    %208 = vector.extract_strided_slice %205 {offsets = [0, 64], sizes = [2, 64], strides = [1, 1]} : vector<2x256xf32> to vector<2x64xf32>
    %209 = vector.extract_strided_slice %206 {offsets = [0, 128], sizes = [2, 64], strides = [1, 1]} : vector<2x256xf32> to vector<2x64xf32>
    %210 = vector.extract_strided_slice %205 {offsets = [0, 192], sizes = [2, 64], strides = [1, 1]} : vector<2x256xf32> to vector<2x64xf32>
    %211 = arith.mulf %208, %189 : vector<2x64xf32>
    %212 = arith.mulf %207, %209 : vector<2x64xf32>
    %213 = arith.addf %211, %212 : vector<2x64xf32>
    %214 = math.tanh %213 : vector<2x64xf32>
    %215 = arith.mulf %210, %214 : vector<2x64xf32>
    %216 = vector.extract_strided_slice %215 {offsets = [0, 0], sizes = [2, 32], strides = [1, 1]} : vector<2x64xf32> to vector<2x32xf32>
    %c14_48 = arith.constant 14 : index
    %c0_49 = arith.constant 0 : index
    %217 = vector.load %arg7[%c14_48, %c0_49] : memref<16x64xf32, #tpu.memory_space<vmem>>, vector<2x32xf32>
    tpu.vector_store %arg7[%c14_48, %c0_49], %216 {strides = array<i32>} : memref<16x64xf32, #tpu.memory_space<vmem>>, vector<2x32xf32>,
    %218 = vector.extract_strided_slice %215 {offsets = [0, 32], sizes = [2, 32], strides = [1, 1]} : vector<2x64xf32> to vector<2x32xf32>
    %c0_50 = arith.constant 0 : index
    %c32_51 = arith.constant 32 : index
    %219 = vector.load %arg7[%c0_50, %c32_51] : memref<16x64xf32, #tpu.memory_space<vmem>>, vector<2x32xf32>
    tpu.vector_store %arg7[%c0_50, %c32_51], %218 {strides = array<i32>} : memref<16x64xf32, #tpu.memory_space<vmem>>, vector<2x32xf32>,
    %c0_52 = arith.constant 0 : index
    %c0_53 = arith.constant 0 : index
    %220 = vector.load %arg7[%c0_52, %c0_53] : memref<16x64xf32, #tpu.memory_space<vmem>>, vector<16x64xf32>
    %c0_54 = arith.constant 0 : index
    %c0_55 = arith.constant 0 : index
    %221 = vector.load %arg4[%c0_54, %c0_55] : memref<64x128xf32, #tpu.memory_space<vmem>>, vector<64x128xf32>
    %cst_56 = arith.constant dense<0.000000e+00> : vector<16x128xf32>
    %222 = tpu.matmul %220, %221, %cst_56 {dimension_numbers = #tpu.dot_dimension_numbers<[1], [0], [0], [1], [0, 0, 1, 1], [], []>} : vector<16x64xf32>, vector<64x128xf32>, vector<16x128xf32> -> vector<16x128xf32>
    %c0_57 = arith.constant 0 : index
    %c0_58 = arith.constant 0 : index
    %223 = vector.load %arg5[%c0_57, %c0_58] : memref<1x128xf32, #tpu.memory_space<vmem>>, vector<1x128xf32>
    %224 = vector.broadcast %223 : vector<1x128xf32> to vector<16x128xf32>
    %225 = arith.addf %222, %224 : vector<16x128xf32>
    %c0_59 = arith.constant 0 : index
    %c0_60 = arith.constant 0 : index
    %226 = vector.load %arg6[%c0_59, %c0_60] : memref<16x128xf32, #tpu.memory_space<vmem>>, vector<16x128xf32>
    tpu.vector_store %arg6[%c0_59, %c0_60], %225 {strides = array<i32>} : memref<16x128xf32, #tpu.memory_space<vmem>>, vector<16x128xf32>,
    return
  }
}

</mosaic_0001>

<llo_original>
// kernel: bidirectional_lstm_forward.1
$region0: #{bidirectional_lstm_forward.1}
  #allocation0 [shape = 'u32[]', space=smem, size = 0x4, offset = 0x4, fixed_abs, tag = 'smem constant byte address 0x4 - core index']
  #allocation1 [shape = 'u32[144,128]{1,0:T(1,128)}', space=vmem, size = 0x12000, scoped, tag = 'internal scratch']
  #allocation2 [shape = 'f32[16,64]{1,0:T(8,128)}', space=vmem, size = 0x2000, scoped, tag = 'scratch operand']
  %s0 = inlined_call_operand.hbm [shape: f32[16,32], index: 0, kind: input, shape index: {}]
  %s1 = inlined_call_operand.hbm [shape: f32[32,256], index: 1, kind: input, shape index: {}]
  %s2 = inlined_call_operand.vmem [shape: f32[1,256], index: 2, kind: input, shape index: {}]
  %s3 = inlined_call_operand.hbm [shape: f32[64,256], index: 3, kind: input, shape index: {}]
  %s4 = inlined_call_operand.hbm [shape: f32[64,128], index: 4, kind: input, shape index: {}]
  %s5 = inlined_call_operand.vmem [shape: f32[1,128], index: 5, kind: input, shape index: {}]
  %s6 = inlined_call_operand.hbm [shape: f32[16,128], index: 6, kind: output, shape index: {}]
  %s7 = sld [smem:[#allocation0]]
  $region50: #{bidirectional_lstm_forward.1} parent=0
    _
  %s9 = ssub.s32 1, %s7
  %s10 = scalar_select 0, %s9, %s7
  $region1: #{bidirectional_lstm_forward.1} parent=0
    #allocation3 [shape = 'u8[8192]{0}', space=vmem, size = 0x2000, scoped, tag = 'input window, operand 0, single buffered']
    #allocation4 [shape = 's32[1]{0}', space=sflag, size = 0x4, scoped, tag = 'scoped memory for bidirectional_lstm_forward.1']
    #allocation5 [shape = 's32[1]{0}', space=sflag, size = 0x4, scoped, tag = 'scoped memory for bidirectional_lstm_forward.1']
    #allocation6 [shape = 'u8[32768]{0}', space=vmem, size = 0x8000, scoped, tag = 'input window, operand 1, single buffered']
    #allocation7 [shape = 's32[1]{0}', space=sflag, size = 0x4, scoped, tag = 'scoped memory for bidirectional_lstm_forward.1']
    #allocation8 [shape = 'u8[65536]{0}', space=vmem, size = 0x10000, scoped, tag = 'input window, operand 3, single buffered']
    #allocation9 [shape = 'u8[32768]{0}', space=vmem, size = 0x8000, scoped, tag = 'input window, operand 4, single buffered']
    #allocation10 [shape = 's32[1]{0}', space=sflag, size = 0x4, scoped, tag = 'scoped memory for bidirectional_lstm_forward.1']
    #allocation11 [shape = 'u8[8192]{0}', space=vmem, size = 0x2000, scoped, tag = 'output window, operand 0, single buffered']
    %11 = vsyncpa [#allocation4], 0
    %12 = vsyncpa [#allocation7], 0
    %13 = vsyncpa [#allocation10], 0
    %14 = vsyncpa [#allocation5], 0
    // Predicated region
    $region2: #{bidirectional_lstm_forward.1} parent=1 // pred_check
      _
    $region3: #{bidirectional_lstm_forward.1} parent=1 // pred_check_branch
      %16 = sbr.rel (0) target = $region5
    $region4: #{bidirectional_lstm_forward.1} parent=1 // pred_region
      %s18 = ssub.s32 256, 256
      %19 = vsyncadd [#allocation4], %s18
      %s20 = sshll.u32 [#allocation3], 4
      %s21 = int_to_ptr.vmem [resolvable:$true] %s20
      %26 = dma.hbm_to_vmem [thread:$0]  %s0, 256, %s21, [#allocation4], 128, 128, 8
    $region5: #{bidirectional_lstm_forward.1} parent=1 // pred_fallthru
      _
    // Predicated region
    $region6: #{bidirectional_lstm_forward.1} parent=1 // pred_check
      _
    $region7: #{bidirectional_lstm_forward.1} parent=1 // pred_check_branch
      %28 = sbr.rel (0) target = $region9
    $region8: #{bidirectional_lstm_forward.1} parent=1 // pred_region
      %s30 = ssub.s32 1024, 1024
      %31 = vsyncadd [#allocation7], %s30
      %s32 = sshll.u32 [#allocation6], 4
      %s33 = int_to_ptr.vmem [resolvable:$true] %s32
      %38 = dma.hbm_to_vmem [thread:$0]  %s1, 1024, %s33, [#allocation7], 256, 256, 16
    $region9: #{bidirectional_lstm_forward.1} parent=1 // pred_fallthru
      _
    // Predicated region
    $region10: #{bidirectional_lstm_forward.1} parent=1 // pred_check
      _
    $region11: #{bidirectional_lstm_forward.1} parent=1 // pred_check_branch
      %40 = sbr.rel (0) target = $region13
    $region12: #{bidirectional_lstm_forward.1} parent=1 // pred_region
      _
    $region13: #{bidirectional_lstm_forward.1} parent=1 // pred_fallthru
      _
    // Predicated region
    $region14: #{bidirectional_lstm_forward.1} parent=1 // pred_check
      _
    $region15: #{bidirectional_lstm_forward.1} parent=1 // pred_check_branch
      %42 = sbr.rel (0) target = $region17
    $region16: #{bidirectional_lstm_forward.1} parent=1 // pred_region
      %s44 = ssub.s32 2048, 2048
      %45 = vsyncadd [#allocation7], %s44
      %s46 = sshll.u32 [#allocation8], 4
      %s47 = int_to_ptr.vmem [resolvable:$true] %s46
      %52 = dma.hbm_to_vmem [thread:$0]  %s3, 2048, %s47, [#allocation7], 256, 256, 16
    $region17: #{bidirectional_lstm_forward.1} parent=1 // pred_fallthru
      _
    // Predicated region
    $region18: #{bidirectional_lstm_forward.1} parent=1 // pred_check
      _
    $region19: #{bidirectional_lstm_forward.1} parent=1 // pred_check_branch
      %54 = sbr.rel (0) target = $region21
    $region20: #{bidirectional_lstm_forward.1} parent=1 // pred_region
      %s56 = ssub.s32 1024, 1024
      %57 = vsyncadd [#allocation10], %s56
      %s58 = sshll.u32 [#allocation9], 4
      %s59 = int_to_ptr.vmem [resolvable:$true] %s58
      %64 = dma.hbm_to_vmem [thread:$0]  %s4, 1024, %s59, [#allocation10], 128, 128, 8
    $region21: #{bidirectional_lstm_forward.1} parent=1 // pred_fallthru
      _
    // Predicated region
    $region22: #{bidirectional_lstm_forward.1} parent=1 // pred_check
      _
    $region23: #{bidirectional_lstm_forward.1} parent=1 // pred_check_branch
      %66 = sbr.rel (0) target = $region25
    $region24: #{bidirectional_lstm_forward.1} parent=1 // pred_region
      _
    $region25: #{bidirectional_lstm_forward.1} parent=1 // pred_fallthru
      _
    // Predicated region
    $region26: #{bidirectional_lstm_forward.1} parent=1 // pred_check
      _
    $region27: #{bidirectional_lstm_forward.1} parent=1 // pred_check_branch
      %68 = sbr.rel (0) target = $region29
    $region28: #{bidirectional_lstm_forward.1} parent=1 // pred_region
      %69 = dma.done [#allocation4], 256
    $region29: #{bidirectional_lstm_forward.1} parent=1 // pred_fallthru
      _
    // Predicated region
    $region30: #{bidirectional_lstm_forward.1} parent=1 // pred_check
      _
    $region31: #{bidirectional_lstm_forward.1} parent=1 // pred_check_branch
      %71 = sbr.rel (0) target = $region33
    $region32: #{bidirectional_lstm_forward.1} parent=1 // pred_region
      %72 = dma.done [#allocation7], 1024
    $region33: #{bidirectional_lstm_forward.1} parent=1 // pred_fallthru
      _
    // Predicated region
    $region34: #{bidirectional_lstm_forward.1} parent=1 // pred_check
      _
    $region35: #{bidirectional_lstm_forward.1} parent=1 // pred_check_branch
      %74 = sbr.rel (0) target = $region37
    $region36: #{bidirectional_lstm_forward.1} parent=1 // pred_region
      %75 = dma.done [#allocation7], 2048
    $region37: #{bidirectional_lstm_forward.1} parent=1 // pred_fallthru
      _
    // Predicated region
    $region38: #{bidirectional_lstm_forward.1} parent=1 // pred_check
      _
    $region39: #{bidirectional_lstm_forward.1} parent=1 // pred_check_branch
      %77 = sbr.rel (0) target = $region41
    $region40: #{bidirectional_lstm_forward.1} parent=1 // pred_region
      %78 = dma.done [#allocation10], 1024
    $region41: #{bidirectional_lstm_forward.1} parent=1 // pred_fallthru
      _
    %v79 = vld [vmem:[#allocation3] sm:$0xff]
    %v80 = vld [vmem:[#allocation3 + $0x8] sm:$0xff]
    %v81 = vld [vmem:[#allocation6] sm:$0xff]
    %v82 = vld [vmem:[#allocation6 + $0x8] sm:$0xff]
    %v83 = vld [vmem:[#allocation6 + $0x10] sm:$0xff]
    %v84 = vld [vmem:[#allocation6 + $0x18] sm:$0xff]
    %v85 = vld [vmem:[#allocation6 + $0x20] sm:$0xff]
    %v86 = vld [vmem:[#allocation6 + $0x28] sm:$0xff]
    %v87 = vld [vmem:[#allocation6 + $0x30] sm:$0xff]
    %v88 = vld [vmem:[#allocation6 + $0x38] sm:$0xff]
    %v89 = vld [vmem:[%s2] sm:$0x3]
    %v91 = vlaneseq
    %v92 = vshrl.u32 %v91, 7
    %v93 = vsub.s32 0, %v92
    %v94 = vrot.slane %v89, %v93
    %v95 = vlaneseq
    %v96 = vshrl.u32 %v95, 7
    %v97 = vsub.s32 1, %v96
    %v98 = vrot.slane %v89, %v97
    %vm101 = vcmask 261120
    %v103 = vsel %vm101, %v79, 0
    %v106 = vsel %vm101, %v80, 0
    %108 = vmatprep.subr.mxu0 %v82
    %109 = vmatpush1.msra.mxu0 %v81
    %110 = vmatprep.subr.mxu0 %v84
    %111 = vmatpush1.msra.mxu0 %v83
    %112 = vmatprep.subr.mxu0 %v86
    %113 = vmatpush1.msra.mxu0 %v85
    %114 = vmatprep.subr.mxu0 %v88
    %115 = vmatpush1.msra.mxu0 %v87
    %116 = vmatprep.subr.mxu0 0.0
    %117 = vmatpush1.msra.mxu0 0.0
    %118 = vmatprep.subr.mxu0 0.0
    %119 = vmatpush1.msra.mxu0 0.0
    %120 = vmatprep.subr.mxu0 0.0
    %121 = vmatpush1.msra.mxu0 0.0
    %122 = vmatprep.subr.mxu0 0.0
    %123 = vmatpush1.msra.mxu0 0.0
    %124 = vmatprep.subr.mxu0 0.0
    %125 = vmatpush1.msra.mxu0 0.0
    %126 = vmatprep.subr.mxu0 0.0
    %127 = vmatpush1.msra.mxu0 0.0
    %128 = vmatprep.subr.mxu0 0.0
    %129 = vmatpush1.msra.mxu0 0.0
    %130 = vmatprep.subr.mxu0 0.0
    %131 = vmatpush1.msra.mxu0 0.0
    %132 = vmatprep.subr.mxu0 0.0
    %133 = vmatpush1.msra.mxu0 0.0
    %134 = vmatprep.subr.mxu0 0.0
    %135 = vmatpush1.msra.mxu0 0.0
    %136 = vmatprep.subr.mxu0 0.0
    %137 = vmatpush1.msra.mxu0 0.0
    %138 = vmatprep.subr.mxu0 0.0
    %139 = vmatpush1.msra.mxu0 0.0
    %140 = vmatprep.subr.mxu0 0.0
    %141 = vmatpush1.msra.mxu0 0.0
    %142 = vmatprep.subr.mxu0 0.0
    %143 = vmatpush1.msra.mxu0 0.0
    %144 = vmatprep.subr.mxu0 0.0
    %145 = vmatpush1.msra.mxu0 0.0
    %146 = vmatprep.subr.mxu0 0.0
    %147 = vmatpush1.msra.mxu0 0.0
    %148 = vmatprep.subr.mxu0 0.0
    %149 = vmatpush1.msra.mxu0 0.0
    %150 = vmatprep.subr.mxu0 0.0
    %151 = vmatpush1.msra.mxu0 0.0
    %152 = vmatprep.subr.mxu0 0.0
    %153 = vmatpush1.msra.mxu0 0.0
    %154 = vmatprep.subr.mxu0 0.0
    %155 = vmatpush1.msra.mxu0 0.0
    %156 = vmatprep.subr.mxu0 0.0
    %157 = vmatpush1.msra.mxu0 0.0
    %158 = vmatprep.subr.mxu0 0.0
    %159 = vmatpush1.msra.mxu0 0.0
    %160 = vmatprep.subr.mxu0 0.0
    %161 = vmatpush1.msra.mxu0 0.0
    %162 = vmatprep.subr.mxu0 0.0
    %163 = vmatpush1.msra.mxu0 0.0
    %164 = vmatprep.subr.mxu0 0.0
    %165 = vmatpush1.msra.mxu0 0.0
    %166 = vmatprep.subr.mxu0 0.0
    %167 = vmatpush1.msra.mxu0 0.0
    %168 = vmatprep.subr.mxu0 0.0
    %169 = vmatpush1.msra.mxu0 0.0
    %170 = vmatprep.subr.mxu0 0.0
    %171 = vmatpush1.msra.mxu0 0.0
    %172 = vmatprep.mubr.f32.mxu0 0.0
    %173 = vmatmul.mubr.f32.gmra.mrb[0].mxu0 %v103
    %v174 = vpop.f32.mrb[0].mxu0
    %v175 = vadd.f32 %v94, %v174
    %v176 = vpop.f32.mrb[0].mxu0
    %v177 = vadd.f32 %v98, %v176
    %178 = vmatprep.mubr.f32.mxu0 0.0
    %179 = vmatmul.mubr.f32.gmra.mrb[0].mxu0 %v106
    %v180 = vpop.f32.mrb[0].mxu0
    %v181 = vadd.f32 %v94, %v180
    %v182 = vpop.f32.mrb[0].mxu0
    %v183 = vadd.f32 %v98, %v182
    %184 = vdwg.mxu0
    %v185 = vld [vmem:[#allocation8] sm:$0xff]
    %v186 = vld [vmem:[#allocation8 + $0x8] sm:$0xff]
    %v187 = vld [vmem:[#allocation8 + $0x10] sm:$0xff]
    %v188 = vld [vmem:[#allocation8 + $0x18] sm:$0xff]
    %v189 = vld [vmem:[#allocation8 + $0x20] sm:$0xff]
    %v190 = vld [vmem:[#allocation8 + $0x28] sm:$0xff]
    %v191 = vld [vmem:[#allocation8 + $0x30] sm:$0xff]
    %v192 = vld [vmem:[#allocation8 + $0x38] sm:$0xff]
    %v193 = vld [vmem:[#allocation8 + $0x40] sm:$0xff]
    %v194 = vld [vmem:[#allocation8 + $0x48] sm:$0xff]
    %v195 = vld [vmem:[#allocation8 + $0x50] sm:$0xff]
    %v196 = vld [vmem:[#allocation8 + $0x58] sm:$0xff]
    %v197 = vld [vmem:[#allocation8 + $0x60] sm:$0xff]
    %v198 = vld [vmem:[#allocation8 + $0x68] sm:$0xff]
    %v199 = vld [vmem:[#allocation8 + $0x70] sm:$0xff]
    %v200 = vld [vmem:[#allocation8 + $0x78] sm:$0xff]
    %v201 = vlaneseq
    %v202 = vand.u32 %v201, 127
    %v203 = vadd.s32 %v202, 128
    %vm204 = vcmp.lt.s32.totalorder %v202, 0
    %v205 = vsub.s32 0, %v202
    %v206 = vsel %vm204, %v205, %v202
    %v207 = vshrl.u32 %v206, 6
    %v208 = vand.u32 %v206, 63
    %v209 = vsub.s32 0, %v208
    %v210 = vsel %vm204, %v209, %v208
    %vm211 = vcmp.lt.s32.totalorder %v203, 0
    %v212 = vsub.s32 0, %v203
    %v213 = vsel %vm211, %v212, %v203
    %v214 = vshrl.u32 %v213, 6
    %v215 = vand.u32 %v213, 63
    %v216 = vsub.s32 0, %v215
    %v217 = vsel %vm211, %v216, %v215
    %vm218 = vcmp.ne.s32.totalorder %v210, 0
    %vm219 = vcmp.ne.s32.totalorder %v217, 0
    %vm220 = vcmp.lt.s32.totalorder %v210, 0
    %vm221 = vcmp.lt.s32.totalorder %v217, 0
    %vm222 = vmand %vm220, %vm218
    %vm223 = vmand %vm221, %vm219
    %v224 = vadd.s32 %v210, 64
    %v225 = vadd.s32 %v217, 64
    %v226 = vsel %vm222, %v224, %v210
    %v227 = vsel %vm223, %v225, %v217
    %vm228 = vcmp.lt.s32.totalorder %v226, 32
    %vm229 = vcmp.lt.s32.totalorder %v227, 32
    %vm230 = vcmask 523264
    %v232 = vsel %vm230, 0.0, 0
    %234 = vmatprep.subr.mxu0 %v186
    %235 = vmatpush1.msra.mxu0 %v185
    %236 = vmatprep.subr.mxu0 %v188
    %237 = vmatpush1.msra.mxu0 %v187
    %238 = vmatprep.subr.mxu0 %v190
    %239 = vmatpush1.msra.mxu0 %v189
    %240 = vmatprep.subr.mxu0 %v192
    %241 = vmatpush1.msra.mxu0 %v191
    %242 = vmatprep.subr.mxu0 %v194
    %243 = vmatpush1.msra.mxu0 %v193
    %244 = vmatprep.subr.mxu0 %v196
    %245 = vmatpush1.msra.mxu0 %v195
    %246 = vmatprep.subr.mxu0 %v198
    %247 = vmatpush1.msra.mxu0 %v197
    %248 = vmatprep.subr.mxu0 %v200
    %249 = vmatpush1.msra.mxu0 %v199
    %250 = vmatprep.subr.mxu0 0.0
    %251 = vmatpush1.msra.mxu0 0.0
    %252 = vmatprep.subr.mxu0 0.0
    %253 = vmatpush1.msra.mxu0 0.0
    %254 = vmatprep.subr.mxu0 0.0
    %255 = vmatpush1.msra.mxu0 0.0
    %256 = vmatprep.subr.mxu0 0.0
    %257 = vmatpush1.msra.mxu0 0.0
    %258 = vmatprep.subr.mxu0 0.0
    %259 = vmatpush1.msra.mxu0 0.0
    %260 = vmatprep.subr.mxu0 0.0
    %261 = vmatpush1.msra.mxu0 0.0
    %262 = vmatprep.subr.mxu0 0.0
    %263 = vmatpush1.msra.mxu0 0.0
    %264 = vmatprep.subr.mxu0 0.0
    %265 = vmatpush1.msra.mxu0 0.0
    %266 = vmatprep.subr.mxu0 0.0
    %267 = vmatpush1.msra.mxu0 0.0
    %268 = vmatprep.subr.mxu0 0.0
    %269 = vmatpush1.msra.mxu0 0.0
    %270 = vmatprep.subr.mxu0 0.0
    %271 = vmatpush1.msra.mxu0 0.0
    %272 = vmatprep.subr.mxu0 0.0
    %273 = vmatpush1.msra.mxu0 0.0
    %274 = vmatprep.subr.mxu0 0.0
    %275 = vmatpush1.msra.mxu0 0.0
    %276 = vmatprep.subr.mxu0 0.0
    %277 = vmatpush1.msra.mxu0 0.0
    %278 = vmatprep.subr.mxu0 0.0
    %279 = vmatpush1.msra.mxu0 0.0
    %280 = vmatprep.subr.mxu0 0.0
    %281 = vmatpush1.msra.mxu0 0.0
    %282 = vmatprep.subr.mxu0 0.0
    %283 = vmatpush1.msra.mxu0 0.0
    %284 = vmatprep.subr.mxu0 0.0
    %285 = vmatpush1.msra.mxu0 0.0
    %286 = vmatprep.subr.mxu0 0.0
    %287 = vmatpush1.msra.mxu0 0.0
    %288 = vmatprep.subr.mxu0 0.0
    %289 = vmatpush1.msra.mxu0 0.0
    %290 = vmatprep.subr.mxu0 0.0
    %291 = vmatpush1.msra.mxu0 0.0
    %292 = vmatprep.subr.mxu0 0.0
    %293 = vmatpush1.msra.mxu0 0.0
    %294 = vmatprep.subr.mxu0 0.0
    %295 = vmatpush1.msra.mxu0 0.0
    %296 = vmatprep.subr.mxu0 0.0
    %297 = vmatpush1.msra.mxu0 0.0
    %298 = vmatprep.mubr.f32.mxu0 0.0
    %299 = vmatmul.mubr.f32.gmra.mrb[0].mxu0 %v232
    %v300 = vpop.f32.mrb[0].mxu0
    %v301 = vadd.f32 0.0, %v300
    %v302 = vpop.f32.mrb[0].mxu0
    %v303 = vadd.f32 0.0, %v302
    %304 = vdwg.mxu0
    %v307 = vrot.slane %v181, 6
    %v308 = vrot.slane %v183, 6
    %v311 = vsel %vm228, %v175, %v307
    %v312 = vsel %vm229, %v177, %v308
    %v313 = vadd.f32 %v311, %v301
    %v314 = vadd.f32 %v312, %v303
    %v315 = vxor.u32 %v313, 2147483648
    %v316 = vxor.u32 %v314, 2147483648
    %v317 = vmul.f32 %v315, 1.442695
    %v318 = vpow.pop %v317
    %v319 = vmul.f32 %v316, 1.442695
    %v320 = vpow.pop %v319
    %v321 = vadd.f32 %v318, 1.0
    %v322 = vadd.f32 %v320, 1.0
    %v323 = vrcp.pop %v321
    %v324 = vmul.f32 1.0, %v323
    %v325 = vrcp.pop %v322
    %v326 = vmul.f32 1.0, %v325
    %v327 = vtanh.pop %v314
    %v328 = vmul.f32 %v324, 0.0
    %v329 = vmul.f32 %v324, %v327
    %331 = vrot.lane.b32.xlu0 %v329, 64
    %v332 = vpop.permute.xlu0 %331
    %v334 = vadd.f32 %v328, %v332
    %v335 = vtanh.pop %v334
    %v336 = vmul.f32 %v326, %v335
    %338 = vrot.lane.b32.xlu0 %v336, 64
    %v339 = vpop.permute.xlu0 %338
    %vm341 = vcmask 254976
    %342 = vst.msk [vmem:[#allocation2] sm:$0x3] %vm341, %v339
    %vm343 = vcmask 517376
    %344 = vst.msk [vmem:[#allocation2 + $0xe] sm:$0x3] %vm343, %v339
    %v345 = vsel %vm230, %v339, 0
    %347 = vmatprep.subr.mxu0 %v186
    %348 = vmatpush1.msra.mxu0 %v185
    %349 = vmatprep.subr.mxu0 %v188
    %350 = vmatpush1.msra.mxu0 %v187
    %351 = vmatprep.subr.mxu0 %v190
    %352 = vmatpush1.msra.mxu0 %v189
    %353 = vmatprep.subr.mxu0 %v192
    %354 = vmatpush1.msra.mxu0 %v191
    %355 = vmatprep.subr.mxu0 %v194
    %356 = vmatpush1.msra.mxu0 %v193
    %357 = vmatprep.subr.mxu0 %v196
    %358 = vmatpush1.msra.mxu0 %v195
    %359 = vmatprep.subr.mxu0 %v198
    %360 = vmatpush1.msra.mxu0 %v197
    %361 = vmatprep.subr.mxu0 %v200
    %362 = vmatpush1.msra.mxu0 %v199
    %363 = vmatprep.subr.mxu0 0.0
    %364 = vmatpush1.msra.mxu0 0.0
    %365 = vmatprep.subr.mxu0 0.0
    %366 = vmatpush1.msra.mxu0 0.0
    %367 = vmatprep.subr.mxu0 0.0
    %368 = vmatpush1.msra.mxu0 0.0
    %369 = vmatprep.subr.mxu0 0.0
    %370 = vmatpush1.msra.mxu0 0.0
    %371 = vmatprep.subr.mxu0 0.0
    %372 = vmatpush1.msra.mxu0 0.0
    %373 = vmatprep.subr.mxu0 0.0
    %374 = vmatpush1.msra.mxu0 0.0
    %375 = vmatprep.subr.mxu0 0.0
    %376 = vmatpush1.msra.mxu0 0.0
    %377 = vmatprep.subr.mxu0 0.0
    %378 = vmatpush1.msra.mxu0 0.0
    %379 = vmatprep.subr.mxu0 0.0
    %380 = vmatpush1.msra.mxu0 0.0
    %381 = vmatprep.subr.mxu0 0.0
    %382 = vmatpush1.msra.mxu0 0.0
    %383 = vmatprep.subr.mxu0 0.0
    %384 = vmatpush1.msra.mxu0 0.0
    %385 = vmatprep.subr.mxu0 0.0
    %386 = vmatpush1.msra.mxu0 0.0
    %387 = vmatprep.subr.mxu0 0.0
    %388 = vmatpush1.msra.mxu0 0.0
    %389 = vmatprep.subr.mxu0 0.0
    %390 = vmatpush1.msra.mxu0 0.0
    %391 = vmatprep.subr.mxu0 0.0
    %392 = vmatpush1.msra.mxu0 0.0
    %393 = vmatprep.subr.mxu0 0.0
    %394 = vmatpush1.msra.mxu0 0.0
    %395 = vmatprep.subr.mxu0 0.0
    %396 = vmatpush1.msra.mxu0 0.0
    %397 = vmatprep.subr.mxu0 0.0
    %398 = vmatpush1.msra.mxu0 0.0
    %399 = vmatprep.subr.mxu0 0.0
    %400 = vmatpush1.msra.mxu0 0.0
    %401 = vmatprep.subr.mxu0 0.0
    %402 = vmatpush1.msra.mxu0 0.0
    %403 = vmatprep.subr.mxu0 0.0
    %404 = vmatpush1.msra.mxu0 0.0
    %405 = vmatprep.subr.mxu0 0.0
    %406 = vmatpush1.msra.mxu0 0.0
    %407 = vmatprep.subr.mxu0 0.0
    %408 = vmatpush1.msra.mxu0 0.0
    %409 = vmatprep.subr.mxu0 0.0
    %410 = vmatpush1.msra.mxu0 0.0
    %411 = vmatprep.mubr.f32.mxu0 0.0
    %412 = vmatmul.mubr.f32.gmra.mrb[0].mxu0 %v345
    %v413 = vpop.f32.mrb[0].mxu0
    %v414 = vadd.f32 0.0, %v413
    %v415 = vpop.f32.mrb[0].mxu0
    %v416 = vadd.f32 0.0, %v415
    %417 = vdwg.mxu0
    %v418 = vrot.slane %v181, 2
    %v419 = vrot.slane %v183, 2
    %v422 = vsel %vm228, %v175, %v418
    %v423 = vsel %vm229, %v177, %v419
    %v426 = vrot.slane %v414, 6
    %v427 = vrot.slane %v416, 6
    %v430 = vadd.f32 %v422, %v426
    %v431 = vadd.f32 %v423, %v427
    %v432 = vxor.u32 %v430, 2147483648
    %v433 = vxor.u32 %v431, 2147483648
    %v434 = vmul.f32 %v432, 1.442695
    %v435 = vpow.pop %v434
    %v436 = vmul.f32 %v433, 1.442695
    %v437 = vpow.pop %v436
    %v438 = vadd.f32 %v435, 1.0
    %v439 = vadd.f32 %v437, 1.0
    %v440 = vrcp.pop %v438
    %v441 = vmul.f32 1.0, %v440
    %v442 = vrcp.pop %v439
    %v443 = vmul.f32 1.0, %v442
    %v444 = vtanh.pop %v431
    %v446 = vrot.slane %v334, 6
    %v448 = vmul.f32 %v441, %v446
    %v449 = vmul.f32 %v441, %v444
    %451 = vrot.lane.b32.xlu0 %v449, 64
    %v452 = vpop.permute.xlu0 %451
    %v454 = vadd.f32 %v448, %v452
    %v455 = vtanh.pop %v454
    %v456 = vmul.f32 %v443, %v455
    %458 = vrot.lane.b32.xlu0 %v456, 64
    %v459 = vpop.permute.xlu0 %458
    %vm461 = vcmask 257026
    %462 = vst.msk [vmem:[#allocation2] sm:$0xc] %vm461, %v459
    %vm463 = vcmask 519426
    %464 = vst.msk [vmem:[#allocation2 + $0xa] sm:$0xc] %vm463, %v459
    %v465 = vrot.slane %v456, 2
    %466 = vrot.lane.b32.xlu0 %v465, 64
    %v467 = vpop.permute.xlu0 %466
    %v468 = vsel %vm230, %v467, 0
    %470 = vmatprep.subr.mxu0 %v186
    %471 = vmatpush1.msra.mxu0 %v185
    %472 = vmatprep.subr.mxu0 %v188
    %473 = vmatpush1.msra.mxu0 %v187
    %474 = vmatprep.subr.mxu0 %v190
    %475 = vmatpush1.msra.mxu0 %v189
    %476 = vmatprep.subr.mxu0 %v192
    %477 = vmatpush1.msra.mxu0 %v191
    %478 = vmatprep.subr.mxu0 %v194
    %479 = vmatpush1.msra.mxu0 %v193
    %480 = vmatprep.subr.mxu0 %v196
    %481 = vmatpush1.msra.mxu0 %v195
    %482 = vmatprep.subr.mxu0 %v198
    %483 = vmatpush1.msra.mxu0 %v197
    %484 = vmatprep.subr.mxu0 %v200
    %485 = vmatpush1.msra.mxu0 %v199
    %486 = vmatprep.subr.mxu0 0.0
    %487 = vmatpush1.msra.mxu0 0.0
    %488 = vmatprep.subr.mxu0 0.0
    %489 = vmatpush1.msra.mxu0 0.0
    %490 = vmatprep.subr.mxu0 0.0
    %491 = vmatpush1.msra.mxu0 0.0
    %492 = vmatprep.subr.mxu0 0.0
    %493 = vmatpush1.msra.mxu0 0.0
    %494 = vmatprep.subr.mxu0 0.0
    %495 = vmatpush1.msra.mxu0 0.0
    %496 = vmatprep.subr.mxu0 0.0
    %497 = vmatpush1.msra.mxu0 0.0
    %498 = vmatprep.subr.mxu0 0.0
    %499 = vmatpush1.msra.mxu0 0.0
    %500 = vmatprep.subr.mxu0 0.0
    %501 = vmatpush1.msra.mxu0 0.0
    %502 = vmatprep.subr.mxu0 0.0
    %503 = vmatpush1.msra.mxu0 0.0
    %504 = vmatprep.subr.mxu0 0.0
    %505 = vmatpush1.msra.mxu0 0.0
    %506 = vmatprep.subr.mxu0 0.0
    %507 = vmatpush1.msra.mxu0 0.0
    %508 = vmatprep.subr.mxu0 0.0
    %509 = vmatpush1.msra.mxu0 0.0
    %510 = vmatprep.subr.mxu0 0.0
    %511 = vmatpush1.msra.mxu0 0.0
    %512 = vmatprep.subr.mxu0 0.0
    %513 = vmatpush1.msra.mxu0 0.0
    %514 = vmatprep.subr.mxu0 0.0
    %515 = vmatpush1.msra.mxu0 0.0
    %516 = vmatprep.subr.mxu0 0.0
    %517 = vmatpush1.msra.mxu0 0.0
    %518 = vmatprep.subr.mxu0 0.0
    %519 = vmatpush1.msra.mxu0 0.0
    %520 = vmatprep.subr.mxu0 0.0
    %521 = vmatpush1.msra.mxu0 0.0
    %522 = vmatprep.subr.mxu0 0.0
    %523 = vmatpush1.msra.mxu0 0.0
    %524 = vmatprep.subr.mxu0 0.0
    %525 = vmatpush1.msra.mxu0 0.0
    %526 = vmatprep.subr.mxu0 0.0
    %527 = vmatpush1.msra.mxu0 0.0
    %528 = vmatprep.subr.mxu0 0.0
    %529 = vmatpush1.msra.mxu0 0.0
    %530 = vmatprep.subr.mxu0 0.0
    %531 = vmatpush1.msra.mxu0 0.0
    %532 = vmatprep.subr.mxu0 0.0
    %533 = vmatpush1.msra.mxu0 0.0
    %534 = vmatprep.mubr.f32.mxu0 0.0
    %535 = vmatmul.mubr.f32.gmra.mrb[0].mxu0 %v468
    %v536 = vpop.f32.mrb[0].mxu0
    %v537 = vadd.f32 0.0, %v536
    %v538 = vpop.f32.mrb[0].mxu0
    %v539 = vadd.f32 0.0, %v538
    %540 = vdwg.mxu0
    %v543 = vrot.slane %v537, 4
    %v544 = vrot.slane %v539, 4
    %v547 = vadd.f32 %v311, %v543
    %v548 = vadd.f32 %v312, %v544
    %v549 = vxor.u32 %v547, 2147483648
    %v550 = vxor.u32 %v548, 2147483648
    %v551 = vmul.f32 %v549, 1.442695
    %v552 = vpow.pop %v551
    %v553 = vmul.f32 %v550, 1.442695
    %v554 = vpow.pop %v553
    %v555 = vadd.f32 %v552, 1.0
    %v556 = vadd.f32 %v554, 1.0
    %v557 = vrcp.pop %v555
    %v558 = vmul.f32 1.0, %v557
    %v559 = vrcp.pop %v556
    %v560 = vmul.f32 1.0, %v559
    %v561 = vtanh.pop %v548
    %v563 = vrot.slane %v454, 6
    %v565 = vmul.f32 %v558, %v563
    %v566 = vmul.f32 %v558, %v561
    %568 = vrot.lane.b32.xlu0 %v566, 64
    %v569 = vpop.permute.xlu0 %568
    %v571 = vadd.f32 %v565, %v569
    %v572 = vtanh.pop %v571
    %v573 = vmul.f32 %v560, %v572
    %575 = vrot.lane.b32.xlu0 %v573, 64
    %v576 = vpop.permute.xlu0 %575
    %vm578 = vcmask 259076
    %579 = vst.msk [vmem:[#allocation2] sm:$0x30] %vm578, %v576
    %vm580 = vcmask 521476
    %581 = vst.msk [vmem:[#allocation2 + $0x6] sm:$0x30] %vm580, %v576
    %v582 = vrot.slane %v573, 4
    %583 = vrot.lane.b32.xlu0 %v582, 64
    %v584 = vpop.permute.xlu0 %583
    %v585 = vsel %vm230, %v584, 0
    %587 = vmatprep.subr.mxu0 %v186
    %588 = vmatpush1.msra.mxu0 %v185
    %589 = vmatprep.subr.mxu0 %v188
    %590 = vmatpush1.msra.mxu0 %v187
    %591 = vmatprep.subr.mxu0 %v190
    %592 = vmatpush1.msra.mxu0 %v189
    %593 = vmatprep.subr.mxu0 %v192
    %594 = vmatpush1.msra.mxu0 %v191
    %595 = vmatprep.subr.mxu0 %v194
    %596 = vmatpush1.msra.mxu0 %v193
    %597 = vmatprep.subr.mxu0 %v196
    %598 = vmatpush1.msra.mxu0 %v195
    %599 = vmatprep.subr.mxu0 %v198
    %600 = vmatpush1.msra.mxu0 %v197
    %601 = vmatprep.subr.mxu0 %v200
    %602 = vmatpush1.msra.mxu0 %v199
    %603 = vmatprep.subr.mxu0 0.0
    %604 = vmatpush1.msra.mxu0 0.0
    %605 = vmatprep.subr.mxu0 0.0
    %606 = vmatpush1.msra.mxu0 0.0
    %607 = vmatprep.subr.mxu0 0.0
    %608 = vmatpush1.msra.mxu0 0.0
    %609 = vmatprep.subr.mxu0 0.0
    %610 = vmatpush1.msra.mxu0 0.0
    %611 = vmatprep.subr.mxu0 0.0
    %612 = vmatpush1.msra.mxu0 0.0
    %613 = vmatprep.subr.mxu0 0.0
    %614 = vmatpush1.msra.mxu0 0.0
    %615 = vmatprep.subr.mxu0 0.0
    %616 = vmatpush1.msra.mxu0 0.0
    %617 = vmatprep.subr.mxu0 0.0
    %618 = vmatpush1.msra.mxu0 0.0
    %619 = vmatprep.subr.mxu0 0.0
    %620 = vmatpush1.msra.mxu0 0.0
    %621 = vmatprep.subr.mxu0 0.0
    %622 = vmatpush1.msra.mxu0 0.0
    %623 = vmatprep.subr.mxu0 0.0
    %624 = vmatpush1.msra.mxu0 0.0
    %625 = vmatprep.subr.mxu0 0.0
    %626 = vmatpush1.msra.mxu0 0.0
    %627 = vmatprep.subr.mxu0 0.0
    %628 = vmatpush1.msra.mxu0 0.0
    %629 = vmatprep.subr.mxu0 0.0
    %630 = vmatpush1.msra.mxu0 0.0
    %631 = vmatprep.subr.mxu0 0.0
    %632 = vmatpush1.msra.mxu0 0.0
    %633 = vmatprep.subr.mxu0 0.0
    %634 = vmatpush1.msra.mxu0 0.0
    %635 = vmatprep.subr.mxu0 0.0
    %636 = vmatpush1.msra.mxu0 0.0
    %637 = vmatprep.subr.mxu0 0.0
    %638 = vmatpush1.msra.mxu0 0.0
    %639 = vmatprep.subr.mxu0 0.0
    %640 = vmatpush1.msra.mxu0 0.0
    %641 = vmatprep.subr.mxu0 0.0
    %642 = vmatpush1.msra.mxu0 0.0
    %643 = vmatprep.subr.mxu0 0.0
    %644 = vmatpush1.msra.mxu0 0.0
    %645 = vmatprep.subr.mxu0 0.0
    %646 = vmatpush1.msra.mxu0 0.0
    %647 = vmatprep.subr.mxu0 0.0
    %648 = vmatpush1.msra.mxu0 0.0
    %649 = vmatprep.subr.mxu0 0.0
    %650 = vmatpush1.msra.mxu0 0.0
    %651 = vmatprep.mubr.f32.mxu0 0.0
    %652 = vmatmul.mubr.f32.gmra.mrb[0].mxu0 %v585
    %v653 = vpop.f32.mrb[0].mxu0
    %v654 = vadd.f32 0.0, %v653
    %v655 = vpop.f32.mrb[0].mxu0
    %v656 = vadd.f32 0.0, %v655
    %657 = vdwg.mxu0
    %v660 = vrot.slane %v654, 2
    %v661 = vrot.slane %v656, 2
    %v664 = vadd.f32 %v422, %v660
    %v665 = vadd.f32 %v423, %v661
    %v666 = vxor.u32 %v664, 2147483648
    %v667 = vxor.u32 %v665, 2147483648
    %v668 = vmul.f32 %v666, 1.442695
    %v669 = vpow.pop %v668
    %v670 = vmul.f32 %v667, 1.442695
    %v671 = vpow.pop %v670
    %v672 = vadd.f32 %v669, 1.0
    %v673 = vadd.f32 %v671, 1.0
    %v674 = vrcp.pop %v672
    %v675 = vmul.f32 1.0, %v674
    %v676 = vrcp.pop %v673
    %v677 = vmul.f32 1.0, %v676
    %v678 = vtanh.pop %v665
    %v680 = vrot.slane %v571, 6
    %v682 = vmul.f32 %v675, %v680
    %v683 = vmul.f32 %v675, %v678
    %685 = vrot.lane.b32.xlu0 %v683, 64
    %v686 = vpop.permute.xlu0 %685
    %v688 = vadd.f32 %v682, %v686
    %v689 = vtanh.pop %v688
    %v690 = vmul.f32 %v677, %v689
    %692 = vrot.lane.b32.xlu0 %v690, 64
    %v693 = vpop.permute.xlu0 %692
    %vm695 = vcmask 261126
    %696 = vst.msk [vmem:[#allocation2] sm:$0xc0] %vm695, %v693
    %vm697 = vcmask 523526
    %698 = vst.msk [vmem:[#allocation2 + $0x2] sm:$0xc0] %vm697, %v693
    %v699 = vrot.slane %v690, 6
    %700 = vrot.lane.b32.xlu0 %v699, 64
    %v701 = vpop.permute.xlu0 %700
    %v702 = vsel %vm230, %v701, 0
    %704 = vmatprep.subr.mxu0 %v186
    %705 = vmatpush1.msra.mxu0 %v185
    %706 = vmatprep.subr.mxu0 %v188
    %707 = vmatpush1.msra.mxu0 %v187
    %708 = vmatprep.subr.mxu0 %v190
    %709 = vmatpush1.msra.mxu0 %v189
    %710 = vmatprep.subr.mxu0 %v192
    %711 = vmatpush1.msra.mxu0 %v191
    %712 = vmatprep.subr.mxu0 %v194
    %713 = vmatpush1.msra.mxu0 %v193
    %714 = vmatprep.subr.mxu0 %v196
    %715 = vmatpush1.msra.mxu0 %v195
    %716 = vmatprep.subr.mxu0 %v198
    %717 = vmatpush1.msra.mxu0 %v197
    %718 = vmatprep.subr.mxu0 %v200
    %719 = vmatpush1.msra.mxu0 %v199
    %720 = vmatprep.subr.mxu0 0.0
    %721 = vmatpush1.msra.mxu0 0.0
    %722 = vmatprep.subr.mxu0 0.0
    %723 = vmatpush1.msra.mxu0 0.0
    %724 = vmatprep.subr.mxu0 0.0
    %725 = vmatpush1.msra.mxu0 0.0
    %726 = vmatprep.subr.mxu0 0.0
    %727 = vmatpush1.msra.mxu0 0.0
    %728 = vmatprep.subr.mxu0 0.0
    %729 = vmatpush1.msra.mxu0 0.0
    %730 = vmatprep.subr.mxu0 0.0
    %731 = vmatpush1.msra.mxu0 0.0
    %732 = vmatprep.subr.mxu0 0.0
    %733 = vmatpush1.msra.mxu0 0.0
    %734 = vmatprep.subr.mxu0 0.0
    %735 = vmatpush1.msra.mxu0 0.0
    %736 = vmatprep.subr.mxu0 0.0
    %737 = vmatpush1.msra.mxu0 0.0
    %738 = vmatprep.subr.mxu0 0.0
    %739 = vmatpush1.msra.mxu0 0.0
    %740 = vmatprep.subr.mxu0 0.0
    %741 = vmatpush1.msra.mxu0 0.0
    %742 = vmatprep.subr.mxu0 0.0
    %743 = vmatpush1.msra.mxu0 0.0
    %744 = vmatprep.subr.mxu0 0.0
    %745 = vmatpush1.msra.mxu0 0.0
    %746 = vmatprep.subr.mxu0 0.0
    %747 = vmatpush1.msra.mxu0 0.0
    %748 = vmatprep.subr.mxu0 0.0
    %749 = vmatpush1.msra.mxu0 0.0
    %750 = vmatprep.subr.mxu0 0.0
    %751 = vmatpush1.msra.mxu0 0.0
    %752 = vmatprep.subr.mxu0 0.0
    %753 = vmatpush1.msra.mxu0 0.0
    %754 = vmatprep.subr.mxu0 0.0
    %755 = vmatpush1.msra.mxu0 0.0
    %756 = vmatprep.subr.mxu0 0.0
    %757 = vmatpush1.msra.mxu0 0.0
    %758 = vmatprep.subr.mxu0 0.0
    %759 = vmatpush1.msra.mxu0 0.0
    %760 = vmatprep.subr.mxu0 0.0
    %761 = vmatpush1.msra.mxu0 0.0
    %762 = vmatprep.subr.mxu0 0.0
    %763 = vmatpush1.msra.mxu0 0.0
    %764 = vmatprep.subr.mxu0 0.0
    %765 = vmatpush1.msra.mxu0 0.0
    %766 = vmatprep.subr.mxu0 0.0
    %767 = vmatpush1.msra.mxu0 0.0
    %768 = vmatprep.mubr.f32.mxu0 0.0
    %769 = vmatmul.mubr.f32.gmra.mrb[0].mxu0 %v702
    %v770 = vpop.f32.mrb[0].mxu0
    %v771 = vadd.f32 0.0, %v770
    %v772 = vpop.f32.mrb[0].mxu0
    %v773 = vadd.f32 0.0, %v772
    %774 = vdwg.mxu0
    %v777 = vrot.slane %v175, 6
    %v778 = vrot.slane %v177, 6
    %v781 = vsel %vm228, %v181, %v777
    %v782 = vsel %vm229, %v183, %v778
    %v783 = vadd.f32 %v781, %v771
    %v784 = vadd.f32 %v782, %v773
    %v785 = vxor.u32 %v783, 2147483648
    %v786 = vxor.u32 %v784, 2147483648
    %v787 = vmul.f32 %v785, 1.442695
    %v788 = vpow.pop %v787
    %v789 = vmul.f32 %v786, 1.442695
    %v790 = vpow.pop %v789
    %v791 = vadd.f32 %v788, 1.0
    %v792 = vadd.f32 %v790, 1.0
    %v793 = vrcp.pop %v791
    %v794 = vmul.f32 1.0, %v793
    %v795 = vrcp.pop %v792
    %v796 = vmul.f32 1.0, %v795
    %v797 = vtanh.pop %v784
    %v799 = vrot.slane %v688, 6
    %v801 = vmul.f32 %v794, %v799
    %v802 = vmul.f32 %v794, %v797
    %804 = vrot.lane.b32.xlu0 %v802, 64
    %v805 = vpop.permute.xlu0 %804
    %v807 = vadd.f32 %v801, %v805
    %v808 = vtanh.pop %v807
    %v809 = vmul.f32 %v796, %v808
    %811 = vrot.lane.b32.xlu0 %v809, 64
    %v812 = vpop.permute.xlu0 %811
    %814 = vst.msk [vmem:[#allocation2 + $0x8] sm:$0x3] %vm341, %v812
    %815 = vst.msk [vmem:[#allocation2 + $0x6] sm:$0x3] %vm343, %v812
    %v816 = vsel %vm230, %v812, 0
    %818 = vmatprep.subr.mxu0 %v186
    %819 = vmatpush1.msra.mxu0 %v185
    %820 = vmatprep.subr.mxu0 %v188
    %821 = vmatpush1.msra.mxu0 %v187
    %822 = vmatprep.subr.mxu0 %v190
    %823 = vmatpush1.msra.mxu0 %v189
    %824 = vmatprep.subr.mxu0 %v192
    %825 = vmatpush1.msra.mxu0 %v191
    %826 = vmatprep.subr.mxu0 %v194
    %827 = vmatpush1.msra.mxu0 %v193
    %828 = vmatprep.subr.mxu0 %v196
    %829 = vmatpush1.msra.mxu0 %v195
    %830 = vmatprep.subr.mxu0 %v198
    %831 = vmatpush1.msra.mxu0 %v197
    %832 = vmatprep.subr.mxu0 %v200
    %833 = vmatpush1.msra.mxu0 %v199
    %834 = vmatprep.subr.mxu0 0.0
    %835 = vmatpush1.msra.mxu0 0.0
    %836 = vmatprep.subr.mxu0 0.0
    %837 = vmatpush1.msra.mxu0 0.0
    %838 = vmatprep.subr.mxu0 0.0
    %839 = vmatpush1.msra.mxu0 0.0
    %840 = vmatprep.subr.mxu0 0.0
    %841 = vmatpush1.msra.mxu0 0.0
    %842 = vmatprep.subr.mxu0 0.0
    %843 = vmatpush1.msra.mxu0 0.0
    %844 = vmatprep.subr.mxu0 0.0
    %845 = vmatpush1.msra.mxu0 0.0
    %846 = vmatprep.subr.mxu0 0.0
    %847 = vmatpush1.msra.mxu0 0.0
    %848 = vmatprep.subr.mxu0 0.0
    %849 = vmatpush1.msra.mxu0 0.0
    %850 = vmatprep.subr.mxu0 0.0
    %851 = vmatpush1.msra.mxu0 0.0
    %852 = vmatprep.subr.mxu0 0.0
    %853 = vmatpush1.msra.mxu0 0.0
    %854 = vmatprep.subr.mxu0 0.0
    %855 = vmatpush1.msra.mxu0 0.0
    %856 = vmatprep.subr.mxu0 0.0
    %857 = vmatpush1.msra.mxu0 0.0
    %858 = vmatprep.subr.mxu0 0.0
    %859 = vmatpush1.msra.mxu0 0.0
    %860 = vmatprep.subr.mxu0 0.0
    %861 = vmatpush1.msra.mxu0 0.0
    %862 = vmatprep.subr.mxu0 0.0
    %863 = vmatpush1.msra.mxu0 0.0
    %864 = vmatprep.subr.mxu0 0.0
    %865 = vmatpush1.msra.mxu0 0.0
    %866 = vmatprep.subr.mxu0 0.0
    %867 = vmatpush1.msra.mxu0 0.0
    %868 = vmatprep.subr.mxu0 0.0
    %869 = vmatpush1.msra.mxu0 0.0
    %870 = vmatprep.subr.mxu0 0.0
    %871 = vmatpush1.msra.mxu0 0.0
    %872 = vmatprep.subr.mxu0 0.0
    %873 = vmatpush1.msra.mxu0 0.0
    %874 = vmatprep.subr.mxu0 0.0
    %875 = vmatpush1.msra.mxu0 0.0
    %876 = vmatprep.subr.mxu0 0.0
    %877 = vmatpush1.msra.mxu0 0.0
    %878 = vmatprep.subr.mxu0 0.0
    %879 = vmatpush1.msra.mxu0 0.0
    %880 = vmatprep.subr.mxu0 0.0
    %881 = vmatpush1.msra.mxu0 0.0
    %882 = vmatprep.mubr.f32.mxu0 0.0
    %883 = vmatmul.mubr.f32.gmra.mrb[0].mxu0 %v816
    %v884 = vpop.f32.mrb[0].mxu0
    %v885 = vadd.f32 0.0, %v884
    %v886 = vpop.f32.mrb[0].mxu0
    %v887 = vadd.f32 0.0, %v886
    %888 = vdwg.mxu0
    %v889 = vrot.slane %v175, 2
    %v890 = vrot.slane %v177, 2
    %v893 = vsel %vm228, %v181, %v889
    %v894 = vsel %vm229, %v183, %v890
    %v897 = vrot.slane %v885, 6
    %v898 = vrot.slane %v887, 6
    %v901 = vadd.f32 %v893, %v897
    %v902 = vadd.f32 %v894, %v898
    %v903 = vxor.u32 %v901, 2147483648
    %v904 = vxor.u32 %v902, 2147483648
    %v905 = vmul.f32 %v903, 1.442695
    %v906 = vpow.pop %v905
    %v907 = vmul.f32 %v904, 1.442695
    %v908 = vpow.pop %v907
    %v909 = vadd.f32 %v906, 1.0
    %v910 = vadd.f32 %v908, 1.0
    %v911 = vrcp.pop %v909
    %v912 = vmul.f32 1.0, %v911
    %v913 = vrcp.pop %v910
    %v914 = vmul.f32 1.0, %v913
    %v915 = vtanh.pop %v902
    %v917 = vrot.slane %v807, 6
    %v919 = vmul.f32 %v912, %v917
    %v920 = vmul.f32 %v912, %v915
    %922 = vrot.lane.b32.xlu0 %v920, 64
    %v923 = vpop.permute.xlu0 %922
    %v925 = vadd.f32 %v919, %v923
    %v926 = vtanh.pop %v925
    %v927 = vmul.f32 %v914, %v926
    %929 = vrot.lane.b32.xlu0 %v927, 64
    %v930 = vpop.permute.xlu0 %929
    %932 = vst.msk [vmem:[#allocation2 + $0x8] sm:$0xc] %vm461, %v930
    %933 = vst.msk [vmem:[#allocation2 + $0x2] sm:$0xc] %vm463, %v930
    %v934 = vrot.slane %v927, 2
    %935 = vrot.lane.b32.xlu0 %v934, 64
    %v936 = vpop.permute.xlu0 %935
    %v937 = vsel %vm230, %v936, 0
    %939 = vmatprep.subr.mxu0 %v186
    %940 = vmatpush1.msra.mxu0 %v185
    %941 = vmatprep.subr.mxu0 %v188
    %942 = vmatpush1.msra.mxu0 %v187
    %943 = vmatprep.subr.mxu0 %v190
    %944 = vmatpush1.msra.mxu0 %v189
    %945 = vmatprep.subr.mxu0 %v192
    %946 = vmatpush1.msra.mxu0 %v191
    %947 = vmatprep.subr.mxu0 %v194
    %948 = vmatpush1.msra.mxu0 %v193
    %949 = vmatprep.subr.mxu0 %v196
    %950 = vmatpush1.msra.mxu0 %v195
    %951 = vmatprep.subr.mxu0 %v198
    %952 = vmatpush1.msra.mxu0 %v197
    %953 = vmatprep.subr.mxu0 %v200
    %954 = vmatpush1.msra.mxu0 %v199
    %955 = vmatprep.subr.mxu0 0.0
    %956 = vmatpush1.msra.mxu0 0.0
    %957 = vmatprep.subr.mxu0 0.0
    %958 = vmatpush1.msra.mxu0 0.0
    %959 = vmatprep.subr.mxu0 0.0
    %960 = vmatpush1.msra.mxu0 0.0
    %961 = vmatprep.subr.mxu0 0.0
    %962 = vmatpush1.msra.mxu0 0.0
    %963 = vmatprep.subr.mxu0 0.0
    %964 = vmatpush1.msra.mxu0 0.0
    %965 = vmatprep.subr.mxu0 0.0
    %966 = vmatpush1.msra.mxu0 0.0
    %967 = vmatprep.subr.mxu0 0.0
    %968 = vmatpush1.msra.mxu0 0.0
    %969 = vmatprep.subr.mxu0 0.0
    %970 = vmatpush1.msra.mxu0 0.0
    %971 = vmatprep.subr.mxu0 0.0
    %972 = vmatpush1.msra.mxu0 0.0
    %973 = vmatprep.subr.mxu0 0.0
    %974 = vmatpush1.msra.mxu0 0.0
    %975 = vmatprep.subr.mxu0 0.0
    %976 = vmatpush1.msra.mxu0 0.0
    %977 = vmatprep.subr.mxu0 0.0
    %978 = vmatpush1.msra.mxu0 0.0
    %979 = vmatprep.subr.mxu0 0.0
    %980 = vmatpush1.msra.mxu0 0.0
    %981 = vmatprep.subr.mxu0 0.0
    %982 = vmatpush1.msra.mxu0 0.0
    %983 = vmatprep.subr.mxu0 0.0
    %984 = vmatpush1.msra.mxu0 0.0
    %985 = vmatprep.subr.mxu0 0.0
    %986 = vmatpush1.msra.mxu0 0.0
    %987 = vmatprep.subr.mxu0 0.0
    %988 = vmatpush1.msra.mxu0 0.0
    %989 = vmatprep.subr.mxu0 0.0
    %990 = vmatpush1.msra.mxu0 0.0
    %991 = vmatprep.subr.mxu0 0.0
    %992 = vmatpush1.msra.mxu0 0.0
    %993 = vmatprep.subr.mxu0 0.0
    %994 = vmatpush1.msra.mxu0 0.0
    %995 = vmatprep.subr.mxu0 0.0
    %996 = vmatpush1.msra.mxu0 0.0
    %997 = vmatprep.subr.mxu0 0.0
    %998 = vmatpush1.msra.mxu0 0.0
    %999 = vmatprep.subr.mxu0 0.0
    %1000 = vmatpush1.msra.mxu0 0.0
    %1001 = vmatprep.subr.mxu0 0.0
    %1002 = vmatpush1.msra.mxu0 0.0
    %1003 = vmatprep.mubr.f32.mxu0 0.0
    %1004 = vmatmul.mubr.f32.gmra.mrb[0].mxu0 %v937
    %v1005 = vpop.f32.mrb[0].mxu0
    %v1006 = vadd.f32 0.0, %v1005
    %v1007 = vpop.f32.mrb[0].mxu0
    %v1008 = vadd.f32 0.0, %v1007
    %1009 = vdwg.mxu0
    %v1012 = vrot.slane %v1006, 4
    %v1013 = vrot.slane %v1008, 4
    %v1016 = vadd.f32 %v781, %v1012
    %v1017 = vadd.f32 %v782, %v1013
    %v1018 = vxor.u32 %v1016, 2147483648
    %v1019 = vxor.u32 %v1017, 2147483648
    %v1020 = vmul.f32 %v1018, 1.442695
    %v1021 = vpow.pop %v1020
    %v1022 = vmul.f32 %v1019, 1.442695
    %v1023 = vpow.pop %v1022
    %v1024 = vadd.f32 %v1021, 1.0
    %v1025 = vadd.f32 %v1023, 1.0
    %v1026 = vrcp.pop %v1024
    %v1027 = vmul.f32 1.0, %v1026
    %v1028 = vrcp.pop %v1025
    %v1029 = vmul.f32 1.0, %v1028
    %v1030 = vtanh.pop %v1017
    %v1032 = vrot.slane %v925, 6
    %v1034 = vmul.f32 %v1027, %v1032
    %v1035 = vmul.f32 %v1027, %v1030
    %1037 = vrot.lane.b32.xlu0 %v1035, 64
    %v1038 = vpop.permute.xlu0 %1037
    %v1040 = vadd.f32 %v1034, %v1038
    %v1041 = vtanh.pop %v1040
    %v1042 = vmul.f32 %v1029, %v1041
    %1044 = vrot.lane.b32.xlu0 %v1042, 64
    %v1045 = vpop.permute.xlu0 %1044
    %1047 = vst.msk [vmem:[#allocation2 + $0x8] sm:$0x30] %vm578, %v1045
    %1048 = vst.msk [vmem:[#allocation2 - $0x2] sm:$0x30] %vm580, %v1045
    %v1049 = vrot.slane %v1042, 4
    %1050 = vrot.lane.b32.xlu0 %v1049, 64
    %v1051 = vpop.permute.xlu0 %1050
    %v1052 = vsel %vm230, %v1051, 0
    %1054 = vmatprep.subr.mxu0 %v186
    %1055 = vmatpush1.msra.mxu0 %v185
    %1056 = vmatprep.subr.mxu0 %v188
    %1057 = vmatpush1.msra.mxu0 %v187
    %1058 = vmatprep.subr.mxu0 %v190
    %1059 = vmatpush1.msra.mxu0 %v189
    %1060 = vmatprep.subr.mxu0 %v192
    %1061 = vmatpush1.msra.mxu0 %v191
    %1062 = vmatprep.subr.mxu0 %v194
    %1063 = vmatpush1.msra.mxu0 %v193
    %1064 = vmatprep.subr.mxu0 %v196
    %1065 = vmatpush1.msra.mxu0 %v195
    %1066 = vmatprep.subr.mxu0 %v198
    %1067 = vmatpush1.msra.mxu0 %v197
    %1068 = vmatprep.subr.mxu0 %v200
    %1069 = vmatpush1.msra.mxu0 %v199
    %1070 = vmatprep.subr.mxu0 0.0
    %1071 = vmatpush1.msra.mxu0 0.0
    %1072 = vmatprep.subr.mxu0 0.0
    %1073 = vmatpush1.msra.mxu0 0.0
    %1074 = vmatprep.subr.mxu0 0.0
    %1075 = vmatpush1.msra.mxu0 0.0
    %1076 = vmatprep.subr.mxu0 0.0
    %1077 = vmatpush1.msra.mxu0 0.0
    %1078 = vmatprep.subr.mxu0 0.0
    %1079 = vmatpush1.msra.mxu0 0.0
    %1080 = vmatprep.subr.mxu0 0.0
    %1081 = vmatpush1.msra.mxu0 0.0
    %1082 = vmatprep.subr.mxu0 0.0
    %1083 = vmatpush1.msra.mxu0 0.0
    %1084 = vmatprep.subr.mxu0 0.0
    %1085 = vmatpush1.msra.mxu0 0.0
    %1086 = vmatprep.subr.mxu0 0.0
    %1087 = vmatpush1.msra.mxu0 0.0
    %1088 = vmatprep.subr.mxu0 0.0
    %1089 = vmatpush1.msra.mxu0 0.0
    %1090 = vmatprep.subr.mxu0 0.0
    %1091 = vmatpush1.msra.mxu0 0.0
    %1092 = vmatprep.subr.mxu0 0.0
    %1093 = vmatpush1.msra.mxu0 0.0
    %1094 = vmatprep.subr.mxu0 0.0
    %1095 = vmatpush1.msra.mxu0 0.0
    %1096 = vmatprep.subr.mxu0 0.0
    %1097 = vmatpush1.msra.mxu0 0.0
    %1098 = vmatprep.subr.mxu0 0.0
    %1099 = vmatpush1.msra.mxu0 0.0
    %1100 = vmatprep.subr.mxu0 0.0
    %1101 = vmatpush1.msra.mxu0 0.0
    %1102 = vmatprep.subr.mxu0 0.0
    %1103 = vmatpush1.msra.mxu0 0.0
    %1104 = vmatprep.subr.mxu0 0.0
    %1105 = vmatpush1.msra.mxu0 0.0
    %1106 = vmatprep.subr.mxu0 0.0
    %1107 = vmatpush1.msra.mxu0 0.0
    %1108 = vmatprep.subr.mxu0 0.0
    %1109 = vmatpush1.msra.mxu0 0.0
    %1110 = vmatprep.subr.mxu0 0.0
    %1111 = vmatpush1.msra.mxu0 0.0
    %1112 = vmatprep.subr.mxu0 0.0
    %1113 = vmatpush1.msra.mxu0 0.0
    %1114 = vmatprep.subr.mxu0 0.0
    %1115 = vmatpush1.msra.mxu0 0.0
    %1116 = vmatprep.subr.mxu0 0.0
    %1117 = vmatpush1.msra.mxu0 0.0
    %1118 = vmatprep.mubr.f32.mxu0 0.0
    %1119 = vmatmul.mubr.f32.gmra.mrb[0].mxu0 %v1052
    %v1120 = vpop.f32.mrb[0].mxu0
    %v1121 = vadd.f32 0.0, %v1120
    %v1122 = vpop.f32.mrb[0].mxu0
    %v1123 = vadd.f32 0.0, %v1122
    %1124 = vdwg.mxu0
    %v1127 = vrot.slane %v1121, 2
    %v1128 = vrot.slane %v1123, 2
    %v1131 = vadd.f32 %v893, %v1127
    %v1132 = vadd.f32 %v894, %v1128
    %v1133 = vxor.u32 %v1131, 2147483648
    %v1134 = vxor.u32 %v1132, 2147483648
    %v1135 = vmul.f32 %v1133, 1.442695
    %v1136 = vpow.pop %v1135
    %v1137 = vmul.f32 %v1134, 1.442695
    %v1138 = vpow.pop %v1137
    %v1139 = vadd.f32 %v1136, 1.0
    %v1140 = vadd.f32 %v1138, 1.0
    %v1141 = vrcp.pop %v1139
    %v1142 = vmul.f32 1.0, %v1141
    %v1143 = vrcp.pop %v1140
    %v1144 = vmul.f32 1.0, %v1143
    %v1145 = vtanh.pop %v1132
    %v1147 = vrot.slane %v1040, 6
    %v1149 = vmul.f32 %v1142, %v1147
    %v1150 = vmul.f32 %v1142, %v1145
    %1152 = vrot.lane.b32.xlu0 %v1150, 64
    %v1153 = vpop.permute.xlu0 %1152
    %v1155 = vadd.f32 %v1149, %v1153
    %v1156 = vtanh.pop %v1155
    %v1157 = vmul.f32 %v1144, %v1156
    %1159 = vrot.lane.b32.xlu0 %v1157, 64
    %v1160 = vpop.permute.xlu0 %1159
    %1162 = vst.msk [vmem:[#allocation2 + $0x8] sm:$0xc0] %vm695, %v1160
    %1163 = vst.msk [vmem:[#allocation2 - $0x6] sm:$0xc0] %vm697, %v1160
    %v1164 = vld [vmem:[#allocation2] sm:$0xff]
    %v1165 = vld [vmem:[#allocation2 + $0x8] sm:$0xff]
    %v1166 = vld [vmem:[#allocation9] sm:$0xff]
    %v1167 = vld [vmem:[#allocation9 + $0x8] sm:$0xff]
    %v1168 = vld [vmem:[#allocation9 + $0x10] sm:$0xff]
    %v1169 = vld [vmem:[#allocation9 + $0x18] sm:$0xff]
    %v1170 = vld [vmem:[#allocation9 + $0x20] sm:$0xff]
    %v1171 = vld [vmem:[#allocation9 + $0x28] sm:$0xff]
    %v1172 = vld [vmem:[#allocation9 + $0x30] sm:$0xff]
    %v1173 = vld [vmem:[#allocation9 + $0x38] sm:$0xff]
    %v1174 = vld [vmem:[%s5] sm:$0x1]
    %v1176 = vlaneseq
    %v1177 = vshrl.u32 %v1176, 7
    %v1178 = vsub.s32 0, %v1177
    %v1179 = vrot.slane %v1174, %v1178
    %v1182 = vsel %vm230, %v1164, 0
    %v1185 = vsel %vm230, %v1165, 0
    %1187 = vmatprep.subr.mxu0 0.0
    %1188 = vmatpush1.msra.mxu0 %v1166
    %1189 = vmatprep.subr.mxu0 0.0
    %1190 = vmatpush1.msra.mxu0 %v1167
    %1191 = vmatprep.subr.mxu0 0.0
    %1192 = vmatpush1.msra.mxu0 %v1168
    %1193 = vmatprep.subr.mxu0 0.0
    %1194 = vmatpush1.msra.mxu0 %v1169
    %1195 = vmatprep.subr.mxu0 0.0
    %1196 = vmatpush1.msra.mxu0 %v1170
    %1197 = vmatprep.subr.mxu0 0.0
    %1198 = vmatpush1.msra.mxu0 %v1171
    %1199 = vmatprep.subr.mxu0 0.0
    %1200 = vmatpush1.msra.mxu0 %v1172
    %1201 = vmatprep.subr.mxu0 0.0
    %1202 = vmatpush1.msra.mxu0 %v1173
    %1203 = vmatprep.subr.mxu0 0.0
    %1204 = vmatpush1.msra.mxu0 0.0
    %1205 = vmatprep.subr.mxu0 0.0
    %1206 = vmatpush1.msra.mxu0 0.0
    %1207 = vmatprep.subr.mxu0 0.0
    %1208 = vmatpush1.msra.mxu0 0.0
    %1209 = vmatprep.subr.mxu0 0.0
    %1210 = vmatpush1.msra.mxu0 0.0
    %1211 = vmatprep.subr.mxu0 0.0
    %1212 = vmatpush1.msra.mxu0 0.0
    %1213 = vmatprep.subr.mxu0 0.0
    %1214 = vmatpush1.msra.mxu0 0.0
    %1215 = vmatprep.subr.mxu0 0.0
    %1216 = vmatpush1.msra.mxu0 0.0
    %1217 = vmatprep.subr.mxu0 0.0
    %1218 = vmatpush1.msra.mxu0 0.0
    %1219 = vmatprep.subr.mxu0 0.0
    %1220 = vmatpush1.msra.mxu0 0.0
    %1221 = vmatprep.subr.mxu0 0.0
    %1222 = vmatpush1.msra.mxu0 0.0
    %1223 = vmatprep.subr.mxu0 0.0
    %1224 = vmatpush1.msra.mxu0 0.0
    %1225 = vmatprep.subr.mxu0 0.0
    %1226 = vmatpush1.msra.mxu0 0.0
    %1227 = vmatprep.subr.mxu0 0.0
    %1228 = vmatpush1.msra.mxu0 0.0
    %1229 = vmatprep.subr.mxu0 0.0
    %1230 = vmatpush1.msra.mxu0 0.0
    %1231 = vmatprep.subr.mxu0 0.0
    %1232 = vmatpush1.msra.mxu0 0.0
    %1233 = vmatprep.subr.mxu0 0.0
    %1234 = vmatpush1.msra.mxu0 0.0
    %1235 = vmatprep.subr.mxu0 0.0
    %1236 = vmatpush1.msra.mxu0 0.0
    %1237 = vmatprep.subr.mxu0 0.0
    %1238 = vmatpush1.msra.mxu0 0.0
    %1239 = vmatprep.subr.mxu0 0.0
    %1240 = vmatpush1.msra.mxu0 0.0
    %1241 = vmatprep.subr.mxu0 0.0
    %1242 = vmatpush1.msra.mxu0 0.0
    %1243 = vmatprep.subr.mxu0 0.0
    %1244 = vmatpush1.msra.mxu0 0.0
    %1245 = vmatprep.subr.mxu0 0.0
    %1246 = vmatpush1.msra.mxu0 0.0
    %1247 = vmatprep.subr.mxu0 0.0
    %1248 = vmatpush1.msra.mxu0 0.0
    %1249 = vmatprep.subr.mxu0 0.0
    %1250 = vmatpush1.msra.mxu0 0.0
    %1251 = vmatprep.mubr.f32.mxu0 0.0
    %1252 = vmatmul.mubr.f32.gmra.mrb[0].mxu0 %v1182
    %v1253 = vpop.f32.mrb[0].mxu0
    %v1254 = vadd.f32 %v1179, %v1253
    %v1255 = vpop.f32.mrb[0].mxu0
    %1256 = vmatprep.mubr.f32.mxu0 0.0
    %1257 = vmatmul.mubr.f32.gmra.mrb[0].mxu0 %v1185
    %v1258 = vpop.f32.mrb[0].mxu0
    %v1259 = vadd.f32 %v1179, %v1258
    %v1260 = vpop.f32.mrb[0].mxu0
    %1261 = vdwg.mxu0
    %1262 = vst [vmem:[#allocation11] sm:$0xff] %v1254
    %1263 = vst [vmem:[#allocation11 + $0x8] sm:$0xff] %v1259
    // Predicated region
    $region42: #{bidirectional_lstm_forward.1} parent=1 // pred_check
      _
    $region43: #{bidirectional_lstm_forward.1} parent=1 // pred_check_branch
      %1265 = sbr.rel (0) target = $region45
    $region44: #{bidirectional_lstm_forward.1} parent=1 // pred_region
      %s1267 = ssub.s32 256, 256
      %1268 = vsyncadd [#allocation5], %s1267
      %s1269 = sshll.u32 [#allocation11], 4
      %s1270 = int_to_ptr.vmem [resolvable:$true] %s1269
      %1275 = dma.vmem_to_hbm [thread:$0]  %s1270, 256, %s6, [#allocation5], 128, 128, 8
    $region45: #{bidirectional_lstm_forward.1} parent=1 // pred_fallthru
      _
    // Predicated region
    $region46: #{bidirectional_lstm_forward.1} parent=1 // pred_check
      _
    $region47: #{bidirectional_lstm_forward.1} parent=1 // pred_check_branch
      %1277 = sbr.rel (0) target = $region49
    $region48: #{bidirectional_lstm_forward.1} parent=1 // pred_region
      %1278 = dma.done [#allocation5], 256
    $region49: #{bidirectional_lstm_forward.1} parent=1 // pred_fallthru
      _
    %1279 = vsyncpa [#allocation4], 1
    %1280 = vsyncpa [#allocation7], 1
    %1281 = vsyncpa [#allocation10], 1
    %1282 = vsyncpa [#allocation5], 1

</llo_original>
